<compile_context>
chip_gen: v7x
topology: tpu7x:2x2x1
jax: 0.10.0
libtpu: 0.0.40
codegen_flags: <defaults>
</compile_context>

<pallas_src>
import functools

import jax
import jax.numpy as jnp
from jax import lax
from jax.experimental import pallas as pl
from jax.experimental.pallas import tpu as pltpu


def _flash_attn_kernel(
    f_ref,      # (1, C8p, tq)  bf16  query projection (channel-major), resident across ki
    g_ref,      # (1, C8p, tk)  bf16  key projection tile (streamed)
    h_ref,      # (1, C,   tk)  bf16  value projection tile (streamed)
    xq_ref,     # (1, C,   tq)  f32   residual tile (resident across ki)
    gamma_ref,  # (1,)          f32   SMEM scalar
    out_ref,    # (1, C,   tq)  f32
    m_scr,      # (1, tq)       f32   running column max (per query)
    l_scr,      # (1, tq)       f32   running column sum
    acc_scr,    # (C, tq)       f32   running (un-normalized) attention output
    *,
    tk,         # static: kv tile width
    n_valid,    # static: number of valid key positions, or None if N % 128 == 0
):
    ki = pl.program_id(2)
    nk = pl.num_programs(2)

    @pl.when(ki == 0)
    def _init():
        m_scr[...] = jnp.full_like(m_scr, -jnp.inf)
        l_scr[...] = jnp.zeros_like(l_scr)
        acc_scr[...] = jnp.zeros_like(acc_scr)

    # Transposed score block: sT[k, q] = sum_c8 g[c8, k] * f[c8, q]
    sT = lax.dot_general(
        g_ref[0], f_ref[0],
        dimension_numbers=(((0,), (0,)), ((), ())),
        preferred_element_type=jnp.float32)                      # (tk, tq)

    if n_valid is not None:
        # Mask padded key positions (bias-only scores) to -inf.  The last kv
        # tile always contains >= 1 valid key (pad < 128 <= tk), so m_new stays
        # finite and no NaNs can appear in the online-softmax update.
        kpos = ki * tk + lax.broadcasted_iota(jnp.int32, sT.shape, 0)
        sT = jnp.where(kpos < n_valid, sT, -jnp.inf)

    # Online (flash) softmax over the streamed key axis (axis 0 of sT).
    m_prev = m_scr[...]                                          # (1, tq)
    m_new = jnp.maximum(m_prev, jnp.max(sT, axis=0, keepdims=True))
    alpha = jnp.exp(m_prev - m_new)                              # (1, tq)
    p = jnp.exp(sT - m_new)                                      # (tk, tq) f32
    l_scr[...] = alpha * l_scr[...] + jnp.sum(p, axis=0, keepdims=True)
    m_scr[...] = m_new
    # acc[c, q] += sum_k h[c, k] * p[k, q]   (standard (M,K)x(K,N) MXU matmul)
    acc_scr[...] = alpha * acc_scr[...] + lax.dot_general(
        h_ref[0], p.astype(h_ref.dtype),
        dimension_numbers=(((1,), (0,)), ((), ())),
        preferred_element_type=jnp.float32)

    @pl.when(ki == nk - 1)
    def _finalize():
        inv_l = pl.reciprocal(l_scr[...], approx=True)           # (1, tq)
        out_ref[0] = gamma_ref[0] * (acc_scr[...] * inv_l) + xq_ref[0]


def _round_up(x, m):
    return ((x + m - 1) // m) * m


def _pick_tile(n, max_tile):
    """Largest multiple of 128 that divides n, preferring >= 256 (v6e/v7x MXU)."""
    best = 128 if n % 128 == 0 else n
    for t in range(256, max_tile + 1, 128):
        if n % t == 0:
            best = t
    return best


@functools.partial(jax.jit, static_argnames=("tq", "tk"))
def self_attention_forward(x_nchw, wf, wg, wh, bf, bg, bh, gamma, *, tq=None, tk=None):
    """SAGAN self-attention forward: gamma * attention(x) + x.

    Args:
      x_nchw: (B, C, W, H) float32 feature maps.
      wf, wg, wh: 1x1-conv weights in torch layout (C_out, C_in):
                  wf/wg: (C//8, C), wh: (C, C).
      bf, bg: (C//8,) biases; bh: (C,) bias; gamma: (1,) learned scale.
    """
    B, C, W, H = x_nchw.shape
    N = W * H
    C8 = C // 8
    assert C8 * 8 == C, "channel must be divisible by 8"

    N_pad = _round_up(N, 128)
    if tk is None:
        tk = _pick_tile(N_pad, 512)
    if tq is None:
        tq = _pick_tile(N_pad, 1024)
        # Keep at least 2 iterations on the parallel grid axes (dual-TC v7x).
        while B * (N_pad // tq) < 2 and tq > 128:
            half = tq // 2
            if N_pad % half == 0 and half % 128 == 0:
                tq = half
            else:
                break
    assert N_pad % tq == 0 and tq % 128 == 0
    assert N_pad % tk == 0 and tk % 128 == 0

    C8p = _round_up(C8, 128)   # lane-dense projection width (zero-padded rows)
    cdt = jnp.bfloat16         # MXU operand dtype; accumulation stays f32

    x_bcn = x_nchw.reshape(B, C, N).astype(jnp.float32)   # pure reshape, no HBM transpose
    if N_pad != N:
        x_bcn = jnp.pad(x_bcn, ((0, 0), (0, 0), (0, N_pad - N)))

    # Projections hoisted out of the streamed kv loop: computed once per batch
    # with f32 accumulation, stored bf16, channel-major (B, C_out, N_pad).
    wf32, wg32, wh32 = (w.astype(jnp.float32) for w in (wf, wg, wh))
    bf32, bg32, bh32 = (b.astype(jnp.float32) for b in (bf, bg, bh))
    f_p = (jnp.einsum('oc,bcn->bon', wf32, x_bcn) + bf32[None, :, None]).astype(cdt)
    g_p = (jnp.einsum('oc,bcn->bon', wg32, x_bcn) + bg32[None, :, None]).astype(cdt)
    h_p = (jnp.einsum('oc,bcn->bon', wh32, x_bcn) + bh32[None, :, None]).astype(cdt)
    if C8p != C8:
        # Padded rows are zero in BOTH f and g, so they contribute 0 to scores.
        cpad = ((0, 0), (0, C8p - C8), (0, 0))
        f_p = jnp.pad(f_p, cpad)
        g_p = jnp.pad(g_p, cpad)

    gamma_k = jnp.asarray(gamma, jnp.float32).reshape(-1)[:1]   # (1,) -> SMEM

    grid = (B, N_pad // tq, N_pad // tk)

    # VMEM budget: double-buffered in/out tiles + f32 flash scratch, 2x headroom.
    tile_bytes = 2 * (C8p * tq * 2 + C8p * tk * 2 + C * tk * 2 + C * tq * 4 + C * tq * 4)
    scratch_bytes = (2 * tq + C * tq) * 4
    vmem_limit = int(min(96 * 2**20, max(16 * 2**20, 2 * (tile_bytes + scratch_bytes))))

    kernel = functools.partial(
        _flash_attn_kernel, tk=tk, n_valid=(N if N_pad != N else None))

    out_bcn = pl.pallas_call(
        kernel,
        out_shape=jax.ShapeDtypeStruct((B, C, N_pad), jnp.float32),
        grid_spec=pltpu.PrefetchScalarGridSpec(
            num_scalar_prefetch=0,
            grid=grid,
            in_specs=[
                pl.BlockSpec((1, C8p, tq), lambda b, qi, ki: (b, 0, qi)),  # f (query side)
                pl.BlockSpec((1, C8p, tk), lambda b, qi, ki: (b, 0, ki)),  # g (streamed)
                pl.BlockSpec((1, C, tk), lambda b, qi, ki: (b, 0, ki)),    # h (streamed)
                pl.BlockSpec((1, C, tq), lambda b, qi, ki: (b, 0, qi)),    # x residual
                pl.BlockSpec(memory_space=pltpu.MemorySpace.SMEM),         # gamma scalar
            ],
            out_specs=pl.BlockSpec((1, C, tq), lambda b, qi, ki: (b, 0, qi)),
            scratch_shapes=[
                pltpu.VMEM((1, tq), jnp.float32),   # running max
                pltpu.VMEM((1, tq), jnp.float32),   # running sum
                pltpu.VMEM((C, tq), jnp.float32),   # output accumulator (channel-major)
            ],
        ),
        compiler_params=pltpu.CompilerParams(
            dimension_semantics=("parallel", "parallel", "arbitrary"),
            vmem_limit_bytes=vmem_limit,
        ),
    )(f_p, g_p, h_p, x_bcn, gamma_k)

    return out_bcn[:, :, :N].reshape(B, C, W, H)


def _reference_forward(x_nchw, wf, wg, wh, bf, bg, bh, gamma):
    """Pure-JAX f32 reference mirroring the PyTorch forward exactly."""
    B, C, W, H = x_nchw.shape
    N = W * H
    x = x_nchw.reshape(B, C, N).astype(jnp.float32)
    f = jnp.einsum('oc,bcn->bno', wf, x) + bf[None, None, :]   # (B, N, C//8)
    g = jnp.einsum('oc,bcn->bon', wg, x) + bg[None, :, None]   # (B, C//8, N)
    h = jnp.einsum('oc,bcn->bon', wh, x) + bh[None, :, None]   # (B, C, N)
    scores = jnp.einsum('bno,bom->bnm', f, g)                  # (B, N, N)
    beta = jax.nn.softmax(scores, axis=-1)
    sa = jnp.einsum('bcm,bnm->bcn', h, beta)                   # (B, C, N)
    return (gamma.reshape(()) * sa + x).reshape(B, C, W, H)


def _run_case(B, C, W, H, tq, tk, key):
    C8 = C // 8
    kx, kwf, kwg, kwh, kbf, kbg, kbh = jax.random.split(key, 7)

    x = jax.random.normal(kx, (B, C, W, H), dtype=jnp.float32)
    # weights in native torch conv layout (C_out, C_in), squeezed 1x1 kernels
    wf = jax.random.normal(kwf, (C8, C), dtype=jnp.float32) * 0.03
    wg = jax.random.normal(kwg, (C8, C), dtype=jnp.float32) * 0.03
    wh = jax.random.normal(kwh, (C, C), dtype=jnp.float32) * 0.1
    bf = jax.random.normal(kbf, (C8,), dtype=jnp.float32) * 0.1
    bg = jax.random.normal(kbg, (C8,), dtype=jnp.float32) * 0.1
    bh = jax.random.normal(kbh, (C,), dtype=jnp.float32) * 0.1
    # The module initializes gamma to 0 (output == x); use a nonzero value so
    # the attention path is actually exercised.
    gamma = jnp.array([0.5], dtype=jnp.float32)

    out = self_attention_forward(x, wf, wg, wh, bf, bg, bh, gamma, tq=tq, tk=tk)
    out = jax.block_until_ready(out)

    ref = _reference_forward(x, wf, wg, wh, bf, bg, bh, gamma)
    assert out.shape == (B, C, W, H)
    # bf16 MXU operands + approx reciprocal -> looser tolerance than pure f32.
    max_err = jnp.max(jnp.abs(out - ref))
    assert jnp.allclose(out, ref, atol=5e-2, rtol=5e-2), f"mismatch, max abs err={max_err}"


if __name__ == "__main__":
    k1, k2 = jax.random.split(jax.random.PRNGKey(0))
    # Case 1: N = 512, tq = tk = 256 -> grid (2, 2, 2): exercises the parallel
    # query-tile axis AND the 2-step streamed online-softmax key axis.
    _run_case(2, 128, 16, 32, 256, 256, k1)
    # Case 2: N = 100 (not a 128-multiple) with default tiles -> exercises the
    # pad-to-128 + key-masking path while output stores stay lane-dense.
    _run_case(2, 64, 10, 10, None, None, k2)
    print("KERNEL_OK")
</pallas_src>

<mosaic_0001>
module attributes {stable_mosaic.version = 11 : i64} {
  func.func @_flash_attn_kernel(%arg0: i32, %arg1: i32, %arg2: i32, %arg3: memref<1x128x256xbf16, #tpu.memory_space<vmem>>, %arg4: memref<1x128x256xbf16, #tpu.memory_space<vmem>>, %arg5: memref<1x128x256xbf16, #tpu.memory_space<vmem>>, %arg6: memref<1x128x256xf32, #tpu.memory_space<vmem>>, %arg7: memref<1xf32, #tpu.memory_space<smem>>, %arg8: memref<1x128x256xf32, #tpu.memory_space<vmem>>, %arg9: memref<1x256xf32, #tpu.memory_space<vmem>>, %arg10: memref<1x256xf32, #tpu.memory_space<vmem>>, %arg11: memref<128x256xf32, #tpu.memory_space<vmem>>) attributes {dimension_semantics = [#tpu.dimension_semantics<parallel>, #tpu.dimension_semantics<parallel>, #tpu.dimension_semantics<arbitrary>], iteration_bounds = array<i64: 2, 2, 2>, scalar_prefetch = 0 : i64, scratch_operands = 3 : i64, tpu.core_type = #tpu.core_type<tc>, window_params = [{transform_indices = @transform_0, window_bounds = array<i64: 1, 128, 256>}, {transform_indices = @transform_1, window_bounds = array<i64: 1, 128, 256>}, {transform_indices = @transform_2, window_bounds = array<i64: 1, 128, 256>}, {transform_indices = @transform_3, window_bounds = array<i64: 1, 128, 256>}, {transform_indices = @transform_4, window_bounds = array<i64: 1>}, {transform_indices = @transform_5, window_bounds = array<i64: 1, 128, 256>}]} {
    %c0_i32 = arith.constant 0 : i32
    %0 = arith.cmpi eq, %arg2, %c0_i32 : i32
    %1 = arith.extui %0 : i1 to i32
    %c0_i32_0 = arith.constant 0 : i32
    %2 = arith.cmpi ne, %1, %c0_i32_0 : i32
    scf.if %2 {
      %cst_25 = arith.constant 0xFF800000 : f32
      %36 = vector.broadcast %cst_25 : f32 to vector<1x256xf32>
      %c0_26 = arith.constant 0 : index
      %c0_27 = arith.constant 0 : index
      %37 = vector.load %arg9[%c0_26, %c0_27] : memref<1x256xf32, #tpu.memory_space<vmem>>, vector<1x256xf32>
      tpu.vector_store %arg9[%c0_26, %c0_27], %36 {strides = array<i32>} : memref<1x256xf32, #tpu.memory_space<vmem>>, vector<1x256xf32>,
      %cst_28 = arith.constant 0.000000e+00 : f32
      %38 = vector.broadcast %cst_28 : f32 to vector<1x256xf32>
      %c0_29 = arith.constant 0 : index
      %c0_30 = arith.constant 0 : index
      %39 = vector.load %arg10[%c0_29, %c0_30] : memref<1x256xf32, #tpu.memory_space<vmem>>, vector<1x256xf32>
      tpu.vector_store %arg10[%c0_29, %c0_30], %38 {strides = array<i32>} : memref<1x256xf32, #tpu.memory_space<vmem>>, vector<1x256xf32>,
      %cst_31 = arith.constant 0.000000e+00 : f32
      %40 = vector.broadcast %cst_31 : f32 to vector<128x256xf32>
      %c0_32 = arith.constant 0 : index
      %c0_33 = arith.constant 0 : index
      %41 = vector.load %arg11[%c0_32, %c0_33] : memref<128x256xf32, #tpu.memory_space<vmem>>, vector<128x256xf32>
      tpu.vector_store %arg11[%c0_32, %c0_33], %40 {strides = array<i32>} : memref<128x256xf32, #tpu.memory_space<vmem>>, vector<128x256xf32>,
    } else {
    }
    %c0 = arith.constant 0 : index
    %c0_1 = arith.constant 0 : index
    %c0_2 = arith.constant 0 : index
    %3 = vector.load %arg4[%c0, %c0_1, %c0_2] : memref<1x128x256xbf16, #tpu.memory_space<vmem>>, vector<1x128x256xbf16>
    %4 = vector.shape_cast %3 : vector<1x128x256xbf16> to vector<128x256xbf16>
    %c0_3 = arith.constant 0 : index
    %c0_4 = arith.constant 0 : index
    %c0_5 = arith.constant 0 : index
    %5 = vector.load %arg3[%c0_3, %c0_4, %c0_5] : memref<1x128x256xbf16, #tpu.memory_space<vmem>>, vector<1x128x256xbf16>
    %6 = vector.shape_cast %5 : vector<1x128x256xbf16> to vector<128x256xbf16>
    %cst = arith.constant dense<0.000000e+00> : vector<256x256xf32>
    %7 = tpu.matmul %4, %6, %cst {dimension_numbers = #tpu.dot_dimension_numbers<[0], [0], [1], [1], [0, 1, 1, 1], [], []>} : vector<128x256xbf16>, vector<128x256xbf16>, vector<256x256xf32> -> vector<256x256xf32>
    %c0_6 = arith.constant 0 : index
    %c0_7 = arith.constant 0 : index
    %8 = vector.load %arg9[%c0_6, %c0_7] : memref<1x256xf32, #tpu.memory_space<vmem>>, vector<1x256xf32>
    %cst_8 = arith.constant dense<0xFF800000> : vector<256xf32>
    %9 = vector.multi_reduction <maximumf>, %7, %cst_8 [0] : vector<256x256xf32> to vector<256xf32>
    %10 = vector.shape_cast %9 : vector<256xf32> to vector<1x256xf32>
    %11 = arith.maximumf %8, %10 : vector<1x256xf32>
    %12 = arith.subf %8, %11 : vector<1x256xf32>
    %13 = math.exp %12 : vector<1x256xf32>
    %14 = vector.broadcast %11 : vector<1x256xf32> to vector<256x256xf32>
    %15 = arith.subf %7, %14 : vector<256x256xf32>
    %16 = math.exp %15 : vector<256x256xf32>
    %c0_9 = arith.constant 0 : index
    %c0_10 = arith.constant 0 : index
    %17 = vector.load %arg10[%c0_9, %c0_10] : memref<1x256xf32, #tpu.memory_space<vmem>>, vector<1x256xf32>
    %18 = arith.mulf %13, %17 : vector<1x256xf32>
    %cst_11 = arith.constant dense<0.000000e+00> : vector<256xf32>
    %19 = vector.multi_reduction <add>, %16, %cst_11 [0] : vector<256x256xf32> to vector<256xf32>
    %20 = vector.shape_cast %19 : vector<256xf32> to vector<1x256xf32>
    %21 = arith.addf %18, %20 : vector<1x256xf32>
    %c0_12 = arith.constant 0 : index
    %c0_13 = arith.constant 0 : index
    %22 = vector.load %arg10[%c0_12, %c0_13] : memref<1x256xf32, #tpu.memory_space<vmem>>, vector<1x256xf32>
    tpu.vector_store %arg10[%c0_12, %c0_13], %21 {strides = array<i32>} : memref<1x256xf32, #tpu.memory_space<vmem>>, vector<1x256xf32>,
    %c0_14 = arith.constant 0 : index
    %c0_15 = arith.constant 0 : index
    %23 = vector.load %arg9[%c0_14, %c0_15] : memref<1x256xf32, #tpu.memory_space<vmem>>, vector<1x256xf32>
    tpu.vector_store %arg9[%c0_14, %c0_15], %11 {strides = array<i32>} : memref<1x256xf32, #tpu.memory_space<vmem>>, vector<1x256xf32>,
    %c0_16 = arith.constant 0 : index
    %c0_17 = arith.constant 0 : index
    %24 = vector.load %arg11[%c0_16, %c0_17] : memref<128x256xf32, #tpu.memory_space<vmem>>, vector<128x256xf32>
    %25 = vector.broadcast %13 : vector<1x256xf32> to vector<128x256xf32>
    %26 = arith.mulf %25, %24 : vector<128x256xf32>
    %c0_18 = arith.constant 0 : index
    %c0_19 = arith.constant 0 : index
    %c0_20 = arith.constant 0 : index
    %27 = vector.load %arg5[%c0_18, %c0_19, %c0_20] : memref<1x128x256xbf16, #tpu.memory_space<vmem>>, vector<1x128x256xbf16>
    %28 = vector.shape_cast %27 : vector<1x128x256xbf16> to vector<128x256xbf16>
    %29 = arith.truncf %16 : vector<256x256xf32> to vector<256x256xbf16>
    %cst_21 = arith.constant dense<0.000000e+00> : vector<128x256xf32>
    %30 = tpu.matmul %28, %29, %cst_21 {dimension_numbers = #tpu.dot_dimension_numbers<[1], [0], [0], [1], [0, 0, 1, 1], [], []>} : vector<128x256xbf16>, vector<256x256xbf16>, vector<128x256xf32> -> vector<128x256xf32>
    %31 = arith.addf %26, %30 : vector<128x256xf32>
    %c0_22 = arith.constant 0 : index
    %c0_23 = arith.constant 0 : index
    %32 = vector.load %arg11[%c0_22, %c0_23] : memref<128x256xf32, #tpu.memory_space<vmem>>, vector<128x256xf32>
    tpu.vector_store %arg11[%c0_22, %c0_23], %31 {strides = array<i32>} : memref<128x256xf32, #tpu.memory_space<vmem>>, vector<128x256xf32>,
    %c1_i32 = arith.constant 1 : i32
    %33 = arith.cmpi eq, %arg2, %c1_i32 : i32
    %34 = arith.extui %33 : i1 to i32
    %c0_i32_24 = arith.constant 0 : i32
    %35 = arith.cmpi ne, %34, %c0_i32_24 : i32
    scf.if %35 {
      %c0_25 = arith.constant 0 : index
      %c0_26 = arith.constant 0 : index
      %36 = vector.load %arg10[%c0_25, %c0_26] : memref<1x256xf32, #tpu.memory_space<vmem>>, vector<1x256xf32>
      %37 = tpu.reciprocal %36 {approx = true} : vector<1x256xf32> -> vector<1x256xf32>
      %c0_27 = arith.constant 0 : index
      %38 = memref.load %arg7[%c0_27] : memref<1xf32, #tpu.memory_space<smem>>
      %c0_28 = arith.constant 0 : index
      %c0_29 = arith.constant 0 : index
      %39 = vector.load %arg11[%c0_28, %c0_29] : memref<128x256xf32, #tpu.memory_space<vmem>>, vector<128x256xf32>
      %40 = vector.broadcast %37 : vector<1x256xf32> to vector<128x256xf32>
      %41 = arith.mulf %39, %40 : vector<128x256xf32>
      %42 = vector.broadcast %38 : f32 to vector<128x256xf32>
      %43 = arith.mulf %42, %41 : vector<128x256xf32>
      %c0_30 = arith.constant 0 : index
      %c0_31 = arith.constant 0 : index
      %c0_32 = arith.constant 0 : index
      %44 = vector.load %arg6[%c0_30, %c0_31, %c0_32] : memref<1x128x256xf32, #tpu.memory_space<vmem>>, vector<1x128x256xf32>
      %45 = vector.shape_cast %44 : vector<1x128x256xf32> to vector<128x256xf32>
      %46 = arith.addf %43, %45 : vector<128x256xf32>
      %c0_33 = arith.constant 0 : index
      %c0_34 = arith.constant 0 : index
      %c0_35 = arith.constant 0 : index
      %47 = vector.load %arg8[%c0_33, %c0_34, %c0_35] : memref<1x128x256xf32, #tpu.memory_space<vmem>>, vector<1x128x256xf32>
      %48 = vector.shape_cast %47 : vector<1x128x256xf32> to vector<128x256xf32>
      %49 = vector.shape_cast %46 : vector<128x256xf32> to vector<1x128x256xf32>
      tpu.vector_store %arg8[%c0_33, %c0_34, %c0_35], %49 {strides = array<i32>} : memref<1x128x256xf32, #tpu.memory_space<vmem>>, vector<1x128x256xf32>,
    } else {
    }
    return
  }
  func.func @transform_0(%arg0: i32, %arg1: i32, %arg2: i32) -> (i32, i32, i32) {
    %c0_i32 = arith.constant 0 : i32
    %c0_i32_0 = arith.constant 0 : i32
    return %arg0, %c0_i32, %arg1 : i32, i32, i32
  }
  func.func @transform_1(%arg0: i32, %arg1: i32, %arg2: i32) -> (i32, i32, i32) {
    %c0_i32 = arith.constant 0 : i32
    %c0_i32_0 = arith.constant 0 : i32
    return %arg0, %c0_i32, %arg2 : i32, i32, i32
  }
  func.func @transform_2(%arg0: i32, %arg1: i32, %arg2: i32) -> (i32, i32, i32) {
    %c0_i32 = arith.constant 0 : i32
    %c0_i32_0 = arith.constant 0 : i32
    return %arg0, %c0_i32, %arg2 : i32, i32, i32
  }
  func.func @transform_3(%arg0: i32, %arg1: i32, %arg2: i32) -> (i32, i32, i32) {
    %c0_i32 = arith.constant 0 : i32
    %c0_i32_0 = arith.constant 0 : i32
    return %arg0, %c0_i32, %arg1 : i32, i32, i32
  }
  func.func @transform_4(%arg0: i32, %arg1: i32, %arg2: i32) -> i32 {
    %c0_i32 = arith.constant 0 : i32
    %c0_i32_0 = arith.constant 0 : i32
    return %c0_i32 : i32
  }
  func.func @transform_5(%arg0: i32, %arg1: i32, %arg2: i32) -> (i32, i32, i32) {
    %c0_i32 = arith.constant 0 : i32
    %c0_i32_0 = arith.constant 0 : i32
    return %arg0, %c0_i32, %arg1 : i32, i32, i32
  }
}

</mosaic_0001>

<llo_original>
// kernel: self_attention_forward.1
$region0: #{self_attention_forward.1}
  #allocation0 [shape = 'u32[]', space=smem, size = 0x4, offset = 0x4, fixed_abs, tag = 'smem constant byte address 0x4 - core index']
  #allocation1 [shape = 'u32[144,128]{1,0:T(1,128)}', space=vmem, size = 0x12000, scoped, tag = 'internal scratch']
  #allocation2 [shape = 'f32[1,256]{1,0:T(1,128)}', space=vmem, size = 0x400, scoped, tag = 'scratch operand']
  #allocation3 [shape = 'f32[1,256]{1,0:T(1,128)}', space=vmem, size = 0x400, scoped, tag = 'scratch operand']
  #allocation4 [shape = 'f32[128,256]{1,0:T(8,128)}', space=vmem, size = 0x20000, scoped, tag = 'scratch operand']
  #allocation5 [shape = 'f32[1]{0:T(128)S(6)}', space=smem, size = 0x200, scoped, tag = 'scoped memory for self_attention_forward.1']
  %s0 = inlined_call_operand.vmem [shape: bf16[2,128,512], index: 0, kind: input, shape index: {}]
  %s1 = inlined_call_operand.vmem [shape: bf16[2,128,512], index: 1, kind: input, shape index: {}]
  %s2 = inlined_call_operand.vmem [shape: bf16[2,128,512], index: 2, kind: input, shape index: {}]
  %s3 = inlined_call_operand.vmem [shape: f32[2,128,512], index: 3, kind: input, shape index: {}]
  %s4 = inlined_call_operand.<no memory space> [shape: f32[1], index: 4, kind: input, shape index: {}]
  %s5 = inlined_call_operand.vmem [shape: f32[2,128,512], index: 5, kind: output, shape index: {}]
  %s6 = sld [smem:[#allocation0]]
  $region217: #{self_attention_forward.1} parent=0
    _
  %s8 = ssub.s32 1, %s6
  %s9 = scalar_select 0, %s8, %s6
  %10 = sst [smem:[#allocation5]] %s4
  $region1: #{self_attention_forward.1} parent=0
    #allocation6 [shape = 'u8[131072]{0}', space=vmem, size = 0x20000, scoped, tag = 'input window, operand 0']
    #allocation7 [shape = 'u8[131072]{0}', space=vmem, size = 0x20000, scoped, tag = 'input window, operand 1']
    #allocation8 [shape = 'u8[131072]{0}', space=vmem, size = 0x20000, scoped, tag = 'input window, operand 2']
    #allocation9 [shape = 'u8[262144]{0}', space=vmem, size = 0x40000, scoped, tag = 'input window, operand 3']
    #allocation10 [shape = 'u8[262144]{0}', space=vmem, size = 0x40000, scoped, tag = 'output window, operand 0']
    loop: start=0, step=1, limit=10
    $region2: #{self_attention_forward.1} parent=1 // loop_pre_header
      _
    $region3: #{self_attention_forward.1} parent=1 // loop_header
      %s12 = sphi 0, %s16
      %p13 = scmp.ge.s32.totalorder %s12, 10
      %s19 = sphi 0, %s38
      %s20 = sphi 0, %s34
      %s21 = sphi 0, %s30
      %s22 = sphi 0, %s19
      %s23 = sphi 0, %s20
      %s24 = sphi 0, %s21
      %s25 = sphi 0, %s22
      %s26 = sphi 0, %s23
      %s27 = sphi 0, %s24
      %s43 = sphi 0, %s45
      %s46 = sphi 0, %s43
      %s47 = sphi 0, %s46
      %s63 = sphi 0, %s47
      %s71 = sphi 0, %s73
      %s74 = sphi 0, %s71
      %s75 = sphi 0, %s74
      %s91 = sphi 0, %s75
      %s99 = sphi 0, %s101
      %s102 = sphi 0, %s99
      %s103 = sphi 0, %s102
      %s119 = sphi 0, %s103
      %s127 = sphi 0, %s129
      %s130 = sphi 0, %s127
      %s131 = sphi 0, %s130
      %s147 = sphi 0, %s131
      %s151 = sphi 0, %s151
      %s153 = sphi 0, %s151
      %s154 = sphi 0, %s153
      %s168 = sphi 0, %s154
      %s176 = sphi 0, %s178
      %s179 = sphi 0, %s176
      %s180 = sphi 0, %s179
      %s196 = sphi 0, %s180
    $region4: #{self_attention_forward.1} parent=1 // loop_header_branch
      %15 = sbr.rel (%p13) target = $region8
    $region5: #{self_attention_forward.1} parent=1 // loop_body
      %s17 = ssub.s32 %s12, 1
      %s18 = ssub.s32 %s12, 2
      %s28 = sadd.s32 1, %s21
      %p29 = scmp.ge.s32.totalorder %s28, 2
      %s30 = scalar_select %p29, 0, %s28
      %s31 = sadd.s32 1, %s20
      %s32 = scalar_select %p29, %s31, %s20
      %p33 = scmp.ge.s32.totalorder %s32, 2
      %s34 = scalar_select %p33, 0, %s32
      %s35 = sadd.s32 1, %s19
      %s36 = scalar_select %p33, %s35, %s19
      %p37 = scmp.ge.s32.totalorder %s36, 2
      %s38 = scalar_select %p37, 0, %s36
      %s39 = ssub.s32 %s19, %s38
      %s40 = ssub.s32 %s20, %s34
      %s41 = sor.u32 %s39, %s40
      %p42 = scmp.eq.s32.totalorder %s41, 0
      %s44 = sadd.s32 %s43, 1
      %s45 = scalar_select %p42, %s43, %s44
      %p48 = pneg %p42
      %p49 = scmp.eq.s32.totalorder %s12, 7
      %p50 = por %p48, %p49
      %p51 = scmp.ne.s32.totalorder %s43, %s46
      %p52 = scmp.eq.s32.totalorder %s12, 0
      %p53 = por %p51, %p52
      %p54 = scmp.ne.s32.totalorder %s43, %s46
      %p55 = scmp.eq.s32.totalorder %s17, 7
      %p56 = por %p54, %p55
      %p57 = scmp.ne.s32.totalorder %s46, %s47
      %p58 = scmp.eq.s32.totalorder %s17, 0
      %p59 = por %p57, %p58
      %p60 = scmp.ne.s32.totalorder %s46, %s47
      %p61 = scmp.eq.s32.totalorder %s18, 7
      %p62 = por %p60, %p61
      %p64 = scmp.ne.s32.totalorder %s47, %s63
      %p65 = scmp.eq.s32.totalorder %s18, 0
      %p66 = por %p64, %p65
      %s67 = ssub.s32 %s19, %s38
      %s68 = ssub.s32 %s21, %s30
      %s69 = sor.u32 %s67, %s68
      %p70 = scmp.eq.s32.totalorder %s69, 0
      %s72 = sadd.s32 %s71, 1
      %s73 = scalar_select %p70, %s71, %s72
      %p76 = pneg %p70
      %p77 = scmp.eq.s32.totalorder %s12, 7
      %p78 = por %p76, %p77
      %p79 = scmp.ne.s32.totalorder %s71, %s74
      %p80 = scmp.eq.s32.totalorder %s12, 0
      %p81 = por %p79, %p80
      %p82 = scmp.ne.s32.totalorder %s71, %s74
      %p83 = scmp.eq.s32.totalorder %s17, 7
      %p84 = por %p82, %p83
      %p85 = scmp.ne.s32.totalorder %s74, %s75
      %p86 = scmp.eq.s32.totalorder %s17, 0
      %p87 = por %p85, %p86
      %p88 = scmp.ne.s32.totalorder %s74, %s75
      %p89 = scmp.eq.s32.totalorder %s18, 7
      %p90 = por %p88, %p89
      %p92 = scmp.ne.s32.totalorder %s75, %s91
      %p93 = scmp.eq.s32.totalorder %s18, 0
      %p94 = por %p92, %p93
      %s95 = ssub.s32 %s19, %s38
      %s96 = ssub.s32 %s21, %s30
      %s97 = sor.u32 %s95, %s96
      %p98 = scmp.eq.s32.totalorder %s97, 0
      %s100 = sadd.s32 %s99, 1
      %s101 = scalar_select %p98, %s99, %s100
      %p104 = pneg %p98
      %p105 = scmp.eq.s32.totalorder %s12, 7
      %p106 = por %p104, %p105
      %p107 = scmp.ne.s32.totalorder %s99, %s102
      %p108 = scmp.eq.s32.totalorder %s12, 0
      %p109 = por %p107, %p108
      %p110 = scmp.ne.s32.totalorder %s99, %s102
      %p111 = scmp.eq.s32.totalorder %s17, 7
      %p112 = por %p110, %p111
      %p113 = scmp.ne.s32.totalorder %s102, %s103
      %p114 = scmp.eq.s32.totalorder %s17, 0
      %p115 = por %p113, %p114
      %p116 = scmp.ne.s32.totalorder %s102, %s103
      %p117 = scmp.eq.s32.totalorder %s18, 7
      %p118 = por %p116, %p117
      %p120 = scmp.ne.s32.totalorder %s103, %s119
      %p121 = scmp.eq.s32.totalorder %s18, 0
      %p122 = por %p120, %p121
      %s123 = ssub.s32 %s19, %s38
      %s124 = ssub.s32 %s20, %s34
      %s125 = sor.u32 %s123, %s124
      %p126 = scmp.eq.s32.totalorder %s125, 0
      %s128 = sadd.s32 %s127, 1
      %s129 = scalar_select %p126, %s127, %s128
      %p132 = pneg %p126
      %p133 = scmp.eq.s32.totalorder %s12, 7
      %p134 = por %p132, %p133
      %p135 = scmp.ne.s32.totalorder %s127, %s130
      %p136 = scmp.eq.s32.totalorder %s12, 0
      %p137 = por %p135, %p136
      %p138 = scmp.ne.s32.totalorder %s127, %s130
      %p139 = scmp.eq.s32.totalorder %s17, 7
      %p140 = por %p138, %p139
      %p141 = scmp.ne.s32.totalorder %s130, %s131
      %p142 = scmp.eq.s32.totalorder %s17, 0
      %p143 = por %p141, %p142
      %p144 = scmp.ne.s32.totalorder %s130, %s131
      %p145 = scmp.eq.s32.totalorder %s18, 7
      %p146 = por %p144, %p145
      %p148 = scmp.ne.s32.totalorder %s131, %s147
      %p149 = scmp.eq.s32.totalorder %s18, 0
      %p150 = por %p148, %p149
      %s152 = sadd.s32 %s151, 1
      %p155 = scmp.eq.s32.totalorder %s12, 7
      %p156 = scmp.ne.s32.totalorder %s151, %s153
      %p157 = scmp.eq.s32.totalorder %s12, 0
      %p158 = por %p156, %p157
      %p159 = scmp.ne.s32.totalorder %s151, %s153
      %p160 = scmp.eq.s32.totalorder %s17, 7
      %p161 = por %p159, %p160
      %p162 = scmp.ne.s32.totalorder %s153, %s154
      %p163 = scmp.eq.s32.totalorder %s17, 0
      %p164 = por %p162, %p163
      %p165 = scmp.ne.s32.totalorder %s153, %s154
      %p166 = scmp.eq.s32.totalorder %s18, 7
      %p167 = por %p165, %p166
      %p169 = scmp.ne.s32.totalorder %s154, %s168
      %p170 = scmp.eq.s32.totalorder %s18, 0
      %p171 = por %p169, %p170
      %s172 = ssub.s32 %s19, %s38
      %s173 = ssub.s32 %s20, %s34
      %s174 = sor.u32 %s172, %s173
      %p175 = scmp.eq.s32.totalorder %s174, 0
      %s177 = sadd.s32 %s176, 1
      %s178 = scalar_select %p175, %s176, %s177
      %p181 = pneg %p175
      %p182 = scmp.eq.s32.totalorder %s12, 7
      %p183 = por %p181, %p182
      %p184 = scmp.ne.s32.totalorder %s176, %s179
      %p185 = scmp.eq.s32.totalorder %s12, 0
      %p186 = por %p184, %p185
      %p187 = scmp.ne.s32.totalorder %s176, %s179
      %p188 = scmp.eq.s32.totalorder %s17, 7
      %p189 = por %p187, %p188
      %p190 = scmp.ne.s32.totalorder %s179, %s180
      %p191 = scmp.eq.s32.totalorder %s17, 0
      %p192 = por %p190, %p191
      %p193 = scmp.ne.s32.totalorder %s179, %s180
      %p194 = scmp.eq.s32.totalorder %s18, 7
      %p195 = por %p193, %p194
      %p197 = scmp.ne.s32.totalorder %s180, %s196
      %p198 = scmp.eq.s32.totalorder %s18, 0
      %p199 = por %p197, %p198
      %p200 = scmp.le.s32.totalorder 1, %s12
      %p201 = scmp.lt.s32.totalorder %s12, 9
      %p202 = pnand %p200, %p201
      %p203 = pneg %p202
      // Predicated region
      $region9: #{self_attention_forward.1} parent=5 // pred_check
        _
      $region10: #{self_attention_forward.1} parent=5 // pred_check_branch
        %205 = sbr.rel (%p202) target = $region12
      $region11: #{self_attention_forward.1} parent=5 // pred_region
        %s206 = ssub.s32 %s12, 1
        // Predicated region
        $region13: #{self_attention_forward.1} parent=11 // pred_check
          %p207 = pneg %p164
        $region14: #{self_attention_forward.1} parent=11 // pred_check_branch
          %209 = sbr.rel (%p207) target = $region16
        $region15: #{self_attention_forward.1} parent=11 // pred_region
          _
        $region16: #{self_attention_forward.1} parent=11 // pred_fallthru
          _
      $region12: #{self_attention_forward.1} parent=5 // pred_fallthru
        _
      %p210 = scmp.lt.s32.totalorder %s12, 8
      // Predicated region
      $region17: #{self_attention_forward.1} parent=5 // pred_check
        %p211 = pneg %p210
      $region18: #{self_attention_forward.1} parent=5 // pred_check_branch
        %213 = sbr.rel (%p211) target = $region20
      $region19: #{self_attention_forward.1} parent=5 // pred_region
        // Predicated region
        $region21: #{self_attention_forward.1} parent=19 // pred_check
          %p214 = pneg %p53
        $region22: #{self_attention_forward.1} parent=19 // pred_check_branch
          %216 = sbr.rel (%p214) target = $region24
        $region23: #{self_attention_forward.1} parent=19 // pred_region
          %s217 = sand.u32 %s43, 1
          %s218 = sand.u32 %s43, 1
          %s219 = smul.addr %s218, 128
          %s220 = scalar_lea.vmem [#allocation6], %s219
          %s221 = smul.u32 2, %s20
          %s222 = smul.addr %s19, 64
          %s223 = sadd.s32 %s221, %s222
          %s224 = smul.addr %s223, 4
          %s225 = scalar_lea.vmem %s0, %s224
          // Predicated region
          $region25: #{self_attention_forward.1} parent=23 // pred_check
            _
          $region26: #{self_attention_forward.1} parent=23 // pred_check_branch
            %227 = sbr.rel (0) target = $region28
          $region27: #{self_attention_forward.1} parent=23 // pred_region
            // Predicated region
            $region29: #{self_attention_forward.1} parent=27 // pred_check
              _
            $region30: #{self_attention_forward.1} parent=27 // pred_check_branch
              %229 = sbr.rel (0) target = $region32
            $region31: #{self_attention_forward.1} parent=27 // pred_region
              // Predicated region
              $region44: #{self_attention_forward.1} parent=31 // pred_check
                _
              $region45: #{self_attention_forward.1} parent=31 // pred_check_branch
                %274 = sbr.rel (0) target = $region47
              $region46: #{self_attention_forward.1} parent=31 // pred_region
                loop: start=0, step=1, limit=1
                $region48: #{self_attention_forward.1} parent=46 // loop_pre_header
                  _
                $region49: #{self_attention_forward.1} parent=46 // loop_header
                  %s276 = sphi 0, %s280
                  %p277 = scmp.ge.s32.totalorder %s276, 1
                  %s281 = sphi %s225, %s225
                  %s282 = sphi %s220, %s220
                $region50: #{self_attention_forward.1} parent=46 // loop_header_branch
                  %279 = sbr.rel (%p277) target = $region54
                $region51: #{self_attention_forward.1} parent=46 // loop_body
                  %v283 = vld [vmem:[%s281] sm:$0xff]
                  %284 = vst [vmem:[%s282] sm:$0xff] %v283
                  %v285 = vld [vmem:[%s281 + $0x10] sm:$0xff]
                  %286 = vst [vmem:[%s282 + $0x8] sm:$0xff] %v285
                  %v287 = vld [vmem:[%s281 + $0x20] sm:$0xff]
                  %288 = vst [vmem:[%s282 + $0x10] sm:$0xff] %v287
                  %v289 = vld [vmem:[%s281 + $0x30] sm:$0xff]
                  %290 = vst [vmem:[%s282 + $0x18] sm:$0xff] %v289
                  %v291 = vld [vmem:[%s281 + $0x40] sm:$0xff]
                  %292 = vst [vmem:[%s282 + $0x20] sm:$0xff] %v291
                  %v293 = vld [vmem:[%s281 + $0x50] sm:$0xff]
                  %294 = vst [vmem:[%s282 + $0x28] sm:$0xff] %v293
                  %v295 = vld [vmem:[%s281 + $0x60] sm:$0xff]
                  %296 = vst [vmem:[%s282 + $0x30] sm:$0xff] %v295
                  %v297 = vld [vmem:[%s281 + $0x70] sm:$0xff]
                  %298 = vst [vmem:[%s282 + $0x38] sm:$0xff] %v297
                  %v299 = vld [vmem:[%s281 + $0x80] sm:$0xff]
                  %300 = vst [vmem:[%s282 + $0x40] sm:$0xff] %v299
                  %v301 = vld [vmem:[%s281 + $0x90] sm:$0xff]
                  %302 = vst [vmem:[%s282 + $0x48] sm:$0xff] %v301
                  %v303 = vld [vmem:[%s281 + $0xa0] sm:$0xff]
                  %304 = vst [vmem:[%s282 + $0x50] sm:$0xff] %v303
                  %v305 = vld [vmem:[%s281 + $0xb0] sm:$0xff]
                  %306 = vst [vmem:[%s282 + $0x58] sm:$0xff] %v305
                  %v307 = vld [vmem:[%s281 + $0xc0] sm:$0xff]
                  %308 = vst [vmem:[%s282 + $0x60] sm:$0xff] %v307
                  %v309 = vld [vmem:[%s281 + $0xd0] sm:$0xff]
                  %310 = vst [vmem:[%s282 + $0x68] sm:$0xff] %v309
                  %v311 = vld [vmem:[%s281 + $0xe0] sm:$0xff]
                  %312 = vst [vmem:[%s282 + $0x70] sm:$0xff] %v311
                  %v313 = vld [vmem:[%s281 + $0xf0] sm:$0xff]
                  %314 = vst [vmem:[%s282 + $0x78] sm:$0xff] %v313
                $region52: #{self_attention_forward.1} parent=46 // loop_footer
                  %s280 = sadd.s32 1, %s276
                $region53: #{self_attention_forward.1} parent=46 // loop_footer_branch
                  %275 = sbr.rel target = $region49
                $region54: #{self_attention_forward.1} parent=46 // loop_exit
                  _
              $region47: #{self_attention_forward.1} parent=31 // pred_fallthru
                _
              // Predicated region
              $region55: #{self_attention_forward.1} parent=31 // pred_check
                _
              $region56: #{self_attention_forward.1} parent=31 // pred_check_branch
                %316 = sbr.rel target = $region58
              $region57: #{self_attention_forward.1} parent=31 // pred_region
                _
              $region58: #{self_attention_forward.1} parent=31 // pred_fallthru
                _
            $region32: #{self_attention_forward.1} parent=27 // pred_fallthru
              _
            // Predicated region
            $region33: #{self_attention_forward.1} parent=27 // pred_check
              _
            $region34: #{self_attention_forward.1} parent=27 // pred_check_branch
              %231 = sbr.rel target = $region36
            $region35: #{self_attention_forward.1} parent=27 // pred_region
              loop: start=0, step=1, limit=1
              $region37: #{self_attention_forward.1} parent=35 // loop_pre_header
                _
              $region38: #{self_attention_forward.1} parent=35 // loop_header
                %s234 = sphi 0, %s238
                %p235 = scmp.ge.s32.totalorder %s234, 1
                %s239 = sphi %s225, %s225
                %s240 = sphi %s220, %s220
              $region39: #{self_attention_forward.1} parent=35 // loop_header_branch
                %237 = sbr.rel (%p235) target = $region43
              $region40: #{self_attention_forward.1} parent=35 // loop_body
                %v241 = vld [vmem:[%s239] sm:$0xff]
                %242 = vst [vmem:[%s240] sm:$0xff] %v241
                %v243 = vld [vmem:[%s239 + $0x10] sm:$0xff]
                %244 = vst [vmem:[%s240 + $0x8] sm:$0xff] %v243
                %v245 = vld [vmem:[%s239 + $0x20] sm:$0xff]
                %246 = vst [vmem:[%s240 + $0x10] sm:$0xff] %v245
                %v247 = vld [vmem:[%s239 + $0x30] sm:$0xff]
                %248 = vst [vmem:[%s240 + $0x18] sm:$0xff] %v247
                %v249 = vld [vmem:[%s239 + $0x40] sm:$0xff]
                %250 = vst [vmem:[%s240 + $0x20] sm:$0xff] %v249
                %v251 = vld [vmem:[%s239 + $0x50] sm:$0xff]
                %252 = vst [vmem:[%s240 + $0x28] sm:$0xff] %v251
                %v253 = vld [vmem:[%s239 + $0x60] sm:$0xff]
                %254 = vst [vmem:[%s240 + $0x30] sm:$0xff] %v253
                %v255 = vld [vmem:[%s239 + $0x70] sm:$0xff]
                %256 = vst [vmem:[%s240 + $0x38] sm:$0xff] %v255
                %v257 = vld [vmem:[%s239 + $0x80] sm:$0xff]
                %258 = vst [vmem:[%s240 + $0x40] sm:$0xff] %v257
                %v259 = vld [vmem:[%s239 + $0x90] sm:$0xff]
                %260 = vst [vmem:[%s240 + $0x48] sm:$0xff] %v259
                %v261 = vld [vmem:[%s239 + $0xa0] sm:$0xff]
                %262 = vst [vmem:[%s240 + $0x50] sm:$0xff] %v261
                %v263 = vld [vmem:[%s239 + $0xb0] sm:$0xff]
                %264 = vst [vmem:[%s240 + $0x58] sm:$0xff] %v263
                %v265 = vld [vmem:[%s239 + $0xc0] sm:$0xff]
                %266 = vst [vmem:[%s240 + $0x60] sm:$0xff] %v265
                %v267 = vld [vmem:[%s239 + $0xd0] sm:$0xff]
                %268 = vst [vmem:[%s240 + $0x68] sm:$0xff] %v267
                %v269 = vld [vmem:[%s239 + $0xe0] sm:$0xff]
                %270 = vst [vmem:[%s240 + $0x70] sm:$0xff] %v269
                %v271 = vld [vmem:[%s239 + $0xf0] sm:$0xff]
                %272 = vst [vmem:[%s240 + $0x78] sm:$0xff] %v271
              $region41: #{self_attention_forward.1} parent=35 // loop_footer
                %s238 = sadd.s32 1, %s234
              $region42: #{self_attention_forward.1} parent=35 // loop_footer_branch
                %233 = sbr.rel target = $region38
              $region43: #{self_attention_forward.1} parent=35 // loop_exit
                _
            $region36: #{self_attention_forward.1} parent=27 // pred_fallthru
              _
          $region28: #{self_attention_forward.1} parent=23 // pred_fallthru
            _
          %317 = vnop
        $region24: #{self_attention_forward.1} parent=19 // pred_fallthru
          _
        // Predicated region
        $region59: #{self_attention_forward.1} parent=19 // pred_check
          %p318 = pneg %p81
        $region60: #{self_attention_forward.1} parent=19 // pred_check_branch
          %320 = sbr.rel (%p318) target = $region62
        $region61: #{self_attention_forward.1} parent=19 // pred_region
          %s321 = sand.u32 %s71, 1
          %s322 = sand.u32 %s71, 1
          %s323 = smul.addr %s322, 128
          %s324 = scalar_lea.vmem [#allocation7], %s323
          %s325 = smul.u32 2, %s21
          %s326 = smul.addr %s19, 64
          %s327 = sadd.s32 %s325, %s326
          %s328 = smul.addr %s327, 4
          %s329 = scalar_lea.vmem %s1, %s328
          // Predicated region
          $region63: #{self_attention_forward.1} parent=61 // pred_check
            _
          $region64: #{self_attention_forward.1} parent=61 // pred_check_branch
            %331 = sbr.rel (0) target = $region66
          $region65: #{self_attention_forward.1} parent=61 // pred_region
            // Predicated region
            $region67: #{self_attention_forward.1} parent=65 // pred_check
              _
            $region68: #{self_attention_forward.1} parent=65 // pred_check_branch
              %333 = sbr.rel (0) target = $region70
            $region69: #{self_attention_forward.1} parent=65 // pred_region
              // Predicated region
              $region82: #{self_attention_forward.1} parent=69 // pred_check
                _
              $region83: #{self_attention_forward.1} parent=69 // pred_check_branch
                %378 = sbr.rel (0) target = $region85
              $region84: #{self_attention_forward.1} parent=69 // pred_region
                loop: start=0, step=1, limit=1
                $region86: #{self_attention_forward.1} parent=84 // loop_pre_header
                  _
                $region87: #{self_attention_forward.1} parent=84 // loop_header
                  %s380 = sphi 0, %s384
                  %p381 = scmp.ge.s32.totalorder %s380, 1
                  %s385 = sphi %s329, %s329
                  %s386 = sphi %s324, %s324
                $region88: #{self_attention_forward.1} parent=84 // loop_header_branch
                  %383 = sbr.rel (%p381) target = $region92
                $region89: #{self_attention_forward.1} parent=84 // loop_body
                  %v387 = vld [vmem:[%s385] sm:$0xff]
                  %388 = vst [vmem:[%s386] sm:$0xff] %v387
                  %v389 = vld [vmem:[%s385 + $0x10] sm:$0xff]
                  %390 = vst [vmem:[%s386 + $0x8] sm:$0xff] %v389
                  %v391 = vld [vmem:[%s385 + $0x20] sm:$0xff]
                  %392 = vst [vmem:[%s386 + $0x10] sm:$0xff] %v391
                  %v393 = vld [vmem:[%s385 + $0x30] sm:$0xff]
                  %394 = vst [vmem:[%s386 + $0x18] sm:$0xff] %v393
                  %v395 = vld [vmem:[%s385 + $0x40] sm:$0xff]
                  %396 = vst [vmem:[%s386 + $0x20] sm:$0xff] %v395
                  %v397 = vld [vmem:[%s385 + $0x50] sm:$0xff]
                  %398 = vst [vmem:[%s386 + $0x28] sm:$0xff] %v397
                  %v399 = vld [vmem:[%s385 + $0x60] sm:$0xff]
                  %400 = vst [vmem:[%s386 + $0x30] sm:$0xff] %v399
                  %v401 = vld [vmem:[%s385 + $0x70] sm:$0xff]
                  %402 = vst [vmem:[%s386 + $0x38] sm:$0xff] %v401
                  %v403 = vld [vmem:[%s385 + $0x80] sm:$0xff]
                  %404 = vst [vmem:[%s386 + $0x40] sm:$0xff] %v403
                  %v405 = vld [vmem:[%s385 + $0x90] sm:$0xff]
                  %406 = vst [vmem:[%s386 + $0x48] sm:$0xff] %v405
                  %v407 = vld [vmem:[%s385 + $0xa0] sm:$0xff]
                  %408 = vst [vmem:[%s386 + $0x50] sm:$0xff] %v407
                  %v409 = vld [vmem:[%s385 + $0xb0] sm:$0xff]
                  %410 = vst [vmem:[%s386 + $0x58] sm:$0xff] %v409
                  %v411 = vld [vmem:[%s385 + $0xc0] sm:$0xff]
                  %412 = vst [vmem:[%s386 + $0x60] sm:$0xff] %v411
                  %v413 = vld [vmem:[%s385 + $0xd0] sm:$0xff]
                  %414 = vst [vmem:[%s386 + $0x68] sm:$0xff] %v413
                  %v415 = vld [vmem:[%s385 + $0xe0] sm:$0xff]
                  %416 = vst [vmem:[%s386 + $0x70] sm:$0xff] %v415
                  %v417 = vld [vmem:[%s385 + $0xf0] sm:$0xff]
                  %418 = vst [vmem:[%s386 + $0x78] sm:$0xff] %v417
                $region90: #{self_attention_forward.1} parent=84 // loop_footer
                  %s384 = sadd.s32 1, %s380
                $region91: #{self_attention_forward.1} parent=84 // loop_footer_branch
                  %379 = sbr.rel target = $region87
                $region92: #{self_attention_forward.1} parent=84 // loop_exit
                  _
              $region85: #{self_attention_forward.1} parent=69 // pred_fallthru
                _
              // Predicated region
              $region93: #{self_attention_forward.1} parent=69 // pred_check
                _
              $region94: #{self_attention_forward.1} parent=69 // pred_check_branch
                %420 = sbr.rel target = $region96
              $region95: #{self_attention_forward.1} parent=69 // pred_region
                _
              $region96: #{self_attention_forward.1} parent=69 // pred_fallthru
                _
            $region70: #{self_attention_forward.1} parent=65 // pred_fallthru
              _
            // Predicated region
            $region71: #{self_attention_forward.1} parent=65 // pred_check
              _
            $region72: #{self_attention_forward.1} parent=65 // pred_check_branch
              %335 = sbr.rel target = $region74
            $region73: #{self_attention_forward.1} parent=65 // pred_region
              loop: start=0, step=1, limit=1
              $region75: #{self_attention_forward.1} parent=73 // loop_pre_header
                _
              $region76: #{self_attention_forward.1} parent=73 // loop_header
                %s338 = sphi 0, %s342
                %p339 = scmp.ge.s32.totalorder %s338, 1
                %s343 = sphi %s329, %s329
                %s344 = sphi %s324, %s324
              $region77: #{self_attention_forward.1} parent=73 // loop_header_branch
                %341 = sbr.rel (%p339) target = $region81
              $region78: #{self_attention_forward.1} parent=73 // loop_body
                %v345 = vld [vmem:[%s343] sm:$0xff]
                %346 = vst [vmem:[%s344] sm:$0xff] %v345
                %v347 = vld [vmem:[%s343 + $0x10] sm:$0xff]
                %348 = vst [vmem:[%s344 + $0x8] sm:$0xff] %v347
                %v349 = vld [vmem:[%s343 + $0x20] sm:$0xff]
                %350 = vst [vmem:[%s344 + $0x10] sm:$0xff] %v349
                %v351 = vld [vmem:[%s343 + $0x30] sm:$0xff]
                %352 = vst [vmem:[%s344 + $0x18] sm:$0xff] %v351
                %v353 = vld [vmem:[%s343 + $0x40] sm:$0xff]
                %354 = vst [vmem:[%s344 + $0x20] sm:$0xff] %v353
                %v355 = vld [vmem:[%s343 + $0x50] sm:$0xff]
                %356 = vst [vmem:[%s344 + $0x28] sm:$0xff] %v355
                %v357 = vld [vmem:[%s343 + $0x60] sm:$0xff]
                %358 = vst [vmem:[%s344 + $0x30] sm:$0xff] %v357
                %v359 = vld [vmem:[%s343 + $0x70] sm:$0xff]
                %360 = vst [vmem:[%s344 + $0x38] sm:$0xff] %v359
                %v361 = vld [vmem:[%s343 + $0x80] sm:$0xff]
                %362 = vst [vmem:[%s344 + $0x40] sm:$0xff] %v361
                %v363 = vld [vmem:[%s343 + $0x90] sm:$0xff]
                %364 = vst [vmem:[%s344 + $0x48] sm:$0xff] %v363
                %v365 = vld [vmem:[%s343 + $0xa0] sm:$0xff]
                %366 = vst [vmem:[%s344 + $0x50] sm:$0xff] %v365
                %v367 = vld [vmem:[%s343 + $0xb0] sm:$0xff]
                %368 = vst [vmem:[%s344 + $0x58] sm:$0xff] %v367
                %v369 = vld [vmem:[%s343 + $0xc0] sm:$0xff]
                %370 = vst [vmem:[%s344 + $0x60] sm:$0xff] %v369
                %v371 = vld [vmem:[%s343 + $0xd0] sm:$0xff]
                %372 = vst [vmem:[%s344 + $0x68] sm:$0xff] %v371
                %v373 = vld [vmem:[%s343 + $0xe0] sm:$0xff]
                %374 = vst [vmem:[%s344 + $0x70] sm:$0xff] %v373
                %v375 = vld [vmem:[%s343 + $0xf0] sm:$0xff]
                %376 = vst [vmem:[%s344 + $0x78] sm:$0xff] %v375
              $region79: #{self_attention_forward.1} parent=73 // loop_footer
                %s342 = sadd.s32 1, %s338
              $region80: #{self_attention_forward.1} parent=73 // loop_footer_branch
                %337 = sbr.rel target = $region76
              $region81: #{self_attention_forward.1} parent=73 // loop_exit
                _
            $region74: #{self_attention_forward.1} parent=65 // pred_fallthru
              _
          $region66: #{self_attention_forward.1} parent=61 // pred_fallthru
            _
          %421 = vnop
        $region62: #{self_attention_forward.1} parent=19 // pred_fallthru
          _
        // Predicated region
        $region97: #{self_attention_forward.1} parent=19 // pred_check
          %p422 = pneg %p109
        $region98: #{self_attention_forward.1} parent=19 // pred_check_branch
          %424 = sbr.rel (%p422) target = $region100
        $region99: #{self_attention_forward.1} parent=19 // pred_region
          %s425 = sand.u32 %s99, 1
          %s426 = sand.u32 %s99, 1
          %s427 = smul.addr %s426, 128
          %s428 = scalar_lea.vmem [#allocation8], %s427
          %s429 = smul.u32 2, %s21
          %s430 = smul.addr %s19, 64
          %s431 = sadd.s32 %s429, %s430
          %s432 = smul.addr %s431, 4
          %s433 = scalar_lea.vmem %s2, %s432
          // Predicated region
          $region101: #{self_attention_forward.1} parent=99 // pred_check
            _
          $region102: #{self_attention_forward.1} parent=99 // pred_check_branch
            %435 = sbr.rel (0) target = $region104
          $region103: #{self_attention_forward.1} parent=99 // pred_region
            // Predicated region
            $region105: #{self_attention_forward.1} parent=103 // pred_check
              _
            $region106: #{self_attention_forward.1} parent=103 // pred_check_branch
              %437 = sbr.rel (0) target = $region108
            $region107: #{self_attention_forward.1} parent=103 // pred_region
              // Predicated region
              $region120: #{self_attention_forward.1} parent=107 // pred_check
                _
              $region121: #{self_attention_forward.1} parent=107 // pred_check_branch
                %482 = sbr.rel (0) target = $region123
              $region122: #{self_attention_forward.1} parent=107 // pred_region
                loop: start=0, step=1, limit=1
                $region124: #{self_attention_forward.1} parent=122 // loop_pre_header
                  _
                $region125: #{self_attention_forward.1} parent=122 // loop_header
                  %s484 = sphi 0, %s488
                  %p485 = scmp.ge.s32.totalorder %s484, 1
                  %s489 = sphi %s433, %s433
                  %s490 = sphi %s428, %s428
                $region126: #{self_attention_forward.1} parent=122 // loop_header_branch
                  %487 = sbr.rel (%p485) target = $region130
                $region127: #{self_attention_forward.1} parent=122 // loop_body
                  %v491 = vld [vmem:[%s489] sm:$0xff]
                  %492 = vst [vmem:[%s490] sm:$0xff] %v491
                  %v493 = vld [vmem:[%s489 + $0x10] sm:$0xff]
                  %494 = vst [vmem:[%s490 + $0x8] sm:$0xff] %v493
                  %v495 = vld [vmem:[%s489 + $0x20] sm:$0xff]
                  %496 = vst [vmem:[%s490 + $0x10] sm:$0xff] %v495
                  %v497 = vld [vmem:[%s489 + $0x30] sm:$0xff]
                  %498 = vst [vmem:[%s490 + $0x18] sm:$0xff] %v497
                  %v499 = vld [vmem:[%s489 + $0x40] sm:$0xff]
                  %500 = vst [vmem:[%s490 + $0x20] sm:$0xff] %v499
                  %v501 = vld [vmem:[%s489 + $0x50] sm:$0xff]
                  %502 = vst [vmem:[%s490 + $0x28] sm:$0xff] %v501
                  %v503 = vld [vmem:[%s489 + $0x60] sm:$0xff]
                  %504 = vst [vmem:[%s490 + $0x30] sm:$0xff] %v503
                  %v505 = vld [vmem:[%s489 + $0x70] sm:$0xff]
                  %506 = vst [vmem:[%s490 + $0x38] sm:$0xff] %v505
                  %v507 = vld [vmem:[%s489 + $0x80] sm:$0xff]
                  %508 = vst [vmem:[%s490 + $0x40] sm:$0xff] %v507
                  %v509 = vld [vmem:[%s489 + $0x90] sm:$0xff]
                  %510 = vst [vmem:[%s490 + $0x48] sm:$0xff] %v509
                  %v511 = vld [vmem:[%s489 + $0xa0] sm:$0xff]
                  %512 = vst [vmem:[%s490 + $0x50] sm:$0xff] %v511
                  %v513 = vld [vmem:[%s489 + $0xb0] sm:$0xff]
                  %514 = vst [vmem:[%s490 + $0x58] sm:$0xff] %v513
                  %v515 = vld [vmem:[%s489 + $0xc0] sm:$0xff]
                  %516 = vst [vmem:[%s490 + $0x60] sm:$0xff] %v515
                  %v517 = vld [vmem:[%s489 + $0xd0] sm:$0xff]
                  %518 = vst [vmem:[%s490 + $0x68] sm:$0xff] %v517
                  %v519 = vld [vmem:[%s489 + $0xe0] sm:$0xff]
                  %520 = vst [vmem:[%s490 + $0x70] sm:$0xff] %v519
                  %v521 = vld [vmem:[%s489 + $0xf0] sm:$0xff]
                  %522 = vst [vmem:[%s490 + $0x78] sm:$0xff] %v521
                $region128: #{self_attention_forward.1} parent=122 // loop_footer
                  %s488 = sadd.s32 1, %s484
                $region129: #{self_attention_forward.1} parent=122 // loop_footer_branch
                  %483 = sbr.rel target = $region125
                $region130: #{self_attention_forward.1} parent=122 // loop_exit
                  _
              $region123: #{self_attention_forward.1} parent=107 // pred_fallthru
                _
              // Predicated region
              $region131: #{self_attention_forward.1} parent=107 // pred_check
                _
              $region132: #{self_attention_forward.1} parent=107 // pred_check_branch
                %524 = sbr.rel target = $region134
              $region133: #{self_attention_forward.1} parent=107 // pred_region
                _
              $region134: #{self_attention_forward.1} parent=107 // pred_fallthru
                _
            $region108: #{self_attention_forward.1} parent=103 // pred_fallthru
              _
            // Predicated region
            $region109: #{self_attention_forward.1} parent=103 // pred_check
              _
            $region110: #{self_attention_forward.1} parent=103 // pred_check_branch
              %439 = sbr.rel target = $region112
            $region111: #{self_attention_forward.1} parent=103 // pred_region
              loop: start=0, step=1, limit=1
              $region113: #{self_attention_forward.1} parent=111 // loop_pre_header
                _
              $region114: #{self_attention_forward.1} parent=111 // loop_header
                %s442 = sphi 0, %s446
                %p443 = scmp.ge.s32.totalorder %s442, 1
                %s447 = sphi %s433, %s433
                %s448 = sphi %s428, %s428
              $region115: #{self_attention_forward.1} parent=111 // loop_header_branch
                %445 = sbr.rel (%p443) target = $region119
              $region116: #{self_attention_forward.1} parent=111 // loop_body
                %v449 = vld [vmem:[%s447] sm:$0xff]
                %450 = vst [vmem:[%s448] sm:$0xff] %v449
                %v451 = vld [vmem:[%s447 + $0x10] sm:$0xff]
                %452 = vst [vmem:[%s448 + $0x8] sm:$0xff] %v451
                %v453 = vld [vmem:[%s447 + $0x20] sm:$0xff]
                %454 = vst [vmem:[%s448 + $0x10] sm:$0xff] %v453
                %v455 = vld [vmem:[%s447 + $0x30] sm:$0xff]
                %456 = vst [vmem:[%s448 + $0x18] sm:$0xff] %v455
                %v457 = vld [vmem:[%s447 + $0x40] sm:$0xff]
                %458 = vst [vmem:[%s448 + $0x20] sm:$0xff] %v457
                %v459 = vld [vmem:[%s447 + $0x50] sm:$0xff]
                %460 = vst [vmem:[%s448 + $0x28] sm:$0xff] %v459
                %v461 = vld [vmem:[%s447 + $0x60] sm:$0xff]
                %462 = vst [vmem:[%s448 + $0x30] sm:$0xff] %v461
                %v463 = vld [vmem:[%s447 + $0x70] sm:$0xff]
                %464 = vst [vmem:[%s448 + $0x38] sm:$0xff] %v463
                %v465 = vld [vmem:[%s447 + $0x80] sm:$0xff]
                %466 = vst [vmem:[%s448 + $0x40] sm:$0xff] %v465
                %v467 = vld [vmem:[%s447 + $0x90] sm:$0xff]
                %468 = vst [vmem:[%s448 + $0x48] sm:$0xff] %v467
                %v469 = vld [vmem:[%s447 + $0xa0] sm:$0xff]
                %470 = vst [vmem:[%s448 + $0x50] sm:$0xff] %v469
                %v471 = vld [vmem:[%s447 + $0xb0] sm:$0xff]
                %472 = vst [vmem:[%s448 + $0x58] sm:$0xff] %v471
                %v473 = vld [vmem:[%s447 + $0xc0] sm:$0xff]
                %474 = vst [vmem:[%s448 + $0x60] sm:$0xff] %v473
                %v475 = vld [vmem:[%s447 + $0xd0] sm:$0xff]
                %476 = vst [vmem:[%s448 + $0x68] sm:$0xff] %v475
                %v477 = vld [vmem:[%s447 + $0xe0] sm:$0xff]
                %478 = vst [vmem:[%s448 + $0x70] sm:$0xff] %v477
                %v479 = vld [vmem:[%s447 + $0xf0] sm:$0xff]
                %480 = vst [vmem:[%s448 + $0x78] sm:$0xff] %v479
              $region117: #{self_attention_forward.1} parent=111 // loop_footer
                %s446 = sadd.s32 1, %s442
              $region118: #{self_attention_forward.1} parent=111 // loop_footer_branch
                %441 = sbr.rel target = $region114
              $region119: #{self_attention_forward.1} parent=111 // loop_exit
                _
            $region112: #{self_attention_forward.1} parent=103 // pred_fallthru
              _
          $region104: #{self_attention_forward.1} parent=99 // pred_fallthru
            _
          %525 = vnop
        $region100: #{self_attention_forward.1} parent=19 // pred_fallthru
          _
        // Predicated region
        $region135: #{self_attention_forward.1} parent=19 // pred_check
          %p526 = pneg %p137
        $region136: #{self_attention_forward.1} parent=19 // pred_check_branch
          %528 = sbr.rel (%p526) target = $region138
        $region137: #{self_attention_forward.1} parent=19 // pred_region
          %s529 = sand.u32 %s127, 1
          %s530 = sand.u32 %s127, 1
          %s531 = smul.addr %s530, 256
          %s532 = scalar_lea.vmem [#allocation9], %s531
          %s533 = smul.u32 2, %s20
          %s534 = smul.addr %s19, 64
          %s535 = sadd.s32 %s533, %s534
          %s536 = smul.addr %s535, 8
          %s537 = scalar_lea.vmem %s3, %s536
          // Predicated region
          $region139: #{self_attention_forward.1} parent=137 // pred_check
            _
          $region140: #{self_attention_forward.1} parent=137 // pred_check_branch
            %539 = sbr.rel (0) target = $region142
          $region141: #{self_attention_forward.1} parent=137 // pred_region
            // Predicated region
            $region143: #{self_attention_forward.1} parent=141 // pred_check
              _
            $region144: #{self_attention_forward.1} parent=141 // pred_check_branch
              %541 = sbr.rel (0) target = $region146
            $region145: #{self_attention_forward.1} parent=141 // pred_region
              loop: start=0, step=1, limit=1
              $region147: #{self_attention_forward.1} parent=145 // loop_pre_header
                _
              $region148: #{self_attention_forward.1} parent=145 // loop_header
                %s543 = sphi 0, %s547
                %p544 = scmp.ge.s32.totalorder %s543, 1
                %s548 = sphi %s537, %s537
                %s549 = sphi %s532, %s532
              $region149: #{self_attention_forward.1} parent=145 // loop_header_branch
                %546 = sbr.rel (%p544) target = $region153
              $region150: #{self_attention_forward.1} parent=145 // loop_body
                %v550 = vld [vmem:[%s548] sm:$0xff]
                %551 = vst [vmem:[%s549] sm:$0xff] %v550
                %v552 = vld [vmem:[%s548 + $0x8] sm:$0xff]
                %553 = vst [vmem:[%s549 + $0x8] sm:$0xff] %v552
                %v554 = vld [vmem:[%s548 + $0x20] sm:$0xff]
                %555 = vst [vmem:[%s549 + $0x10] sm:$0xff] %v554
                %v556 = vld [vmem:[%s548 + $0x28] sm:$0xff]
                %557 = vst [vmem:[%s549 + $0x18] sm:$0xff] %v556
                %v558 = vld [vmem:[%s548 + $0x40] sm:$0xff]
                %559 = vst [vmem:[%s549 + $0x20] sm:$0xff] %v558
                %v560 = vld [vmem:[%s548 + $0x48] sm:$0xff]
                %561 = vst [vmem:[%s549 + $0x28] sm:$0xff] %v560
                %v562 = vld [vmem:[%s548 + $0x60] sm:$0xff]
                %563 = vst [vmem:[%s549 + $0x30] sm:$0xff] %v562
                %v564 = vld [vmem:[%s548 + $0x68] sm:$0xff]
                %565 = vst [vmem:[%s549 + $0x38] sm:$0xff] %v564
                %v566 = vld [vmem:[%s548 + $0x80] sm:$0xff]
                %567 = vst [vmem:[%s549 + $0x40] sm:$0xff] %v566
                %v568 = vld [vmem:[%s548 + $0x88] sm:$0xff]
                %569 = vst [vmem:[%s549 + $0x48] sm:$0xff] %v568
                %v570 = vld [vmem:[%s548 + $0xa0] sm:$0xff]
                %571 = vst [vmem:[%s549 + $0x50] sm:$0xff] %v570
                %v572 = vld [vmem:[%s548 + $0xa8] sm:$0xff]
                %573 = vst [vmem:[%s549 + $0x58] sm:$0xff] %v572
                %v574 = vld [vmem:[%s548 + $0xc0] sm:$0xff]
                %575 = vst [vmem:[%s549 + $0x60] sm:$0xff] %v574
                %v576 = vld [vmem:[%s548 + $0xc8] sm:$0xff]
                %577 = vst [vmem:[%s549 + $0x68] sm:$0xff] %v576
                %v578 = vld [vmem:[%s548 + $0xe0] sm:$0xff]
                %579 = vst [vmem:[%s549 + $0x70] sm:$0xff] %v578
                %v580 = vld [vmem:[%s548 + $0xe8] sm:$0xff]
                %581 = vst [vmem:[%s549 + $0x78] sm:$0xff] %v580
                %v582 = vld [vmem:[%s548 + $0x100] sm:$0xff]
                %583 = vst [vmem:[%s549 + $0x80] sm:$0xff] %v582
                %v584 = vld [vmem:[%s548 + $0x108] sm:$0xff]
                %585 = vst [vmem:[%s549 + $0x88] sm:$0xff] %v584
                %v586 = vld [vmem:[%s548 + $0x120] sm:$0xff]
                %587 = vst [vmem:[%s549 + $0x90] sm:$0xff] %v586
                %v588 = vld [vmem:[%s548 + $0x128] sm:$0xff]
                %589 = vst [vmem:[%s549 + $0x98] sm:$0xff] %v588
                %v590 = vld [vmem:[%s548 + $0x140] sm:$0xff]
                %591 = vst [vmem:[%s549 + $0xa0] sm:$0xff] %v590
                %v592 = vld [vmem:[%s548 + $0x148] sm:$0xff]
                %593 = vst [vmem:[%s549 + $0xa8] sm:$0xff] %v592
                %v594 = vld [vmem:[%s548 + $0x160] sm:$0xff]
                %595 = vst [vmem:[%s549 + $0xb0] sm:$0xff] %v594
                %v596 = vld [vmem:[%s548 + $0x168] sm:$0xff]
                %597 = vst [vmem:[%s549 + $0xb8] sm:$0xff] %v596
                %v598 = vld [vmem:[%s548 + $0x180] sm:$0xff]
                %599 = vst [vmem:[%s549 + $0xc0] sm:$0xff] %v598
                %v600 = vld [vmem:[%s548 + $0x188] sm:$0xff]
                %601 = vst [vmem:[%s549 + $0xc8] sm:$0xff] %v600
                %v602 = vld [vmem:[%s548 + $0x1a0] sm:$0xff]
                %603 = vst [vmem:[%s549 + $0xd0] sm:$0xff] %v602
                %v604 = vld [vmem:[%s548 + $0x1a8] sm:$0xff]
                %605 = vst [vmem:[%s549 + $0xd8] sm:$0xff] %v604
                %v606 = vld [vmem:[%s548 + $0x1c0] sm:$0xff]
                %607 = vst [vmem:[%s549 + $0xe0] sm:$0xff] %v606
                %v608 = vld [vmem:[%s548 + $0x1c8] sm:$0xff]
                %609 = vst [vmem:[%s549 + $0xe8] sm:$0xff] %v608
                %v610 = vld [vmem:[%s548 + $0x1e0] sm:$0xff]
                %611 = vst [vmem:[%s549 + $0xf0] sm:$0xff] %v610
                %v612 = vld [vmem:[%s548 + $0x1e8] sm:$0xff]
                %613 = vst [vmem:[%s549 + $0xf8] sm:$0xff] %v612
              $region151: #{self_attention_forward.1} parent=145 // loop_footer
                %s547 = sadd.s32 1, %s543
              $region152: #{self_attention_forward.1} parent=145 // loop_footer_branch
                %542 = sbr.rel target = $region148
              $region153: #{self_attention_forward.1} parent=145 // loop_exit
                _
            $region146: #{self_attention_forward.1} parent=141 // pred_fallthru
              _
            // Predicated region
            $region154: #{self_attention_forward.1} parent=141 // pred_check
              _
            $region155: #{self_attention_forward.1} parent=141 // pred_check_branch
              %615 = sbr.rel target = $region157
            $region156: #{self_attention_forward.1} parent=141 // pred_region
              _
            $region157: #{self_attention_forward.1} parent=141 // pred_fallthru
              _
          $region142: #{self_attention_forward.1} parent=137 // pred_fallthru
            _
          %616 = vnop
        $region138: #{self_attention_forward.1} parent=19 // pred_fallthru
          _
      $region20: #{self_attention_forward.1} parent=5 // pred_fallthru
        _
      %p617 = scmp.le.s32.totalorder 1, %s12
      %p618 = scmp.lt.s32.totalorder %s12, 9
      %p619 = pnand %p617, %p618
      %p620 = pneg %p619
      // Predicated region
      $region158: #{self_attention_forward.1} parent=5 // pred_check
        _
      $region159: #{self_attention_forward.1} parent=5 // pred_check_branch
        %622 = sbr.rel (%p619) target = $region161
      $region160: #{self_attention_forward.1} parent=5 // pred_region
        %s623 = ssub.s32 %s12, 1
        %s624 = sand.u32 %s46, 1
        %s625 = sand.u32 %s46, 1
        %s626 = smul.addr %s625, 128
        %s627 = scalar_lea.vmem [#allocation6], %s626
        // Predicated region
        $region162: #{self_attention_forward.1} parent=160 // pred_check
          %p628 = pneg %p59
        $region163: #{self_attention_forward.1} parent=160 // pred_check_branch
          %630 = sbr.rel (%p628) target = $region165
        $region164: #{self_attention_forward.1} parent=160 // pred_region
          _
        $region165: #{self_attention_forward.1} parent=160 // pred_fallthru
          _
        %s631 = sand.u32 %s74, 1
        %s632 = sand.u32 %s74, 1
        %s633 = smul.addr %s632, 128
        %s634 = scalar_lea.vmem [#allocation7], %s633
        // Predicated region
        $region166: #{self_attention_forward.1} parent=160 // pred_check
          %p635 = pneg %p87
        $region167: #{self_attention_forward.1} parent=160 // pred_check_branch
          %637 = sbr.rel (%p635) target = $region169
        $region168: #{self_attention_forward.1} parent=160 // pred_region
          _
        $region169: #{self_attention_forward.1} parent=160 // pred_fallthru
          _
        %s638 = sand.u32 %s102, 1
        %s639 = sand.u32 %s102, 1
        %s640 = smul.addr %s639, 128
        %s641 = scalar_lea.vmem [#allocation8], %s640
        // Predicated region
        $region170: #{self_attention_forward.1} parent=160 // pred_check
          %p642 = pneg %p115
        $region171: #{self_attention_forward.1} parent=160 // pred_check_branch
          %644 = sbr.rel (%p642) target = $region173
        $region172: #{self_attention_forward.1} parent=160 // pred_region
          _
        $region173: #{self_attention_forward.1} parent=160 // pred_fallthru
          _
        %s645 = sand.u32 %s130, 1
        %s646 = sand.u32 %s130, 1
        %s647 = smul.addr %s646, 256
        %s648 = scalar_lea.vmem [#allocation9], %s647
        // Predicated region
        $region174: #{self_attention_forward.1} parent=160 // pred_check
          %p649 = pneg %p143
        $region175: #{self_attention_forward.1} parent=160 // pred_check_branch
          %651 = sbr.rel (%p649) target = $region177
        $region176: #{self_attention_forward.1} parent=160 // pred_region
          _
        $region177: #{self_attention_forward.1} parent=160 // pred_fallthru
          _
        %s652 = sand.u32 %s46, 1
        %s653 = sand.u32 %s46, 1
        %s654 = smul.addr %s653, 128
        %s655 = scalar_lea.vmem [#allocation6], %s654
        %p656 = pneg %p59
        %p657 = pneg %p56
        %s658 = sand.u32 %s74, 1
        %s659 = sand.u32 %s74, 1
        %s660 = smul.addr %s659, 128
        %s661 = scalar_lea.vmem [#allocation7], %s660
        %p662 = pneg %p87
        %p663 = pneg %p84
        %s664 = sand.u32 %s102, 1
        %s665 = sand.u32 %s102, 1
        %s666 = smul.addr %s665, 128
        %s667 = scalar_lea.vmem [#allocation8], %s666
        %p668 = pneg %p115
        %p669 = pneg %p112
        %s670 = sand.u32 %s130, 1
        %s671 = sand.u32 %s130, 1
        %s672 = smul.addr %s671, 256
        %s673 = scalar_lea.vmem [#allocation9], %s672
        %p674 = pneg %p143
        %p675 = pneg %p140
        %p676 = pneg %p164
        %p677 = pneg %p161
        %p678 = pneg %p192
        %p679 = pneg %p189
        %s680 = sand.u32 %s179, 1
        %s681 = sand.u32 %s179, 1
        %s682 = smul.addr %s681, 256
        %s683 = scalar_lea.vmem [#allocation10], %s682
        %s684 = smul.u32 2, %s23
        %s685 = smul.u32 2, %s24
        %s686 = smul.u32 2, %s24
        %s687 = smul.u32 2, %s23
        %s688 = smul.u32 2, %s23
        %p690 = scmp.eq.s32.totalorder %s24, 0
        // Predicated region
        $region178: #{self_attention_forward.1} parent=160 // pred_check
          %p691 = pneg %p690
        $region179: #{self_attention_forward.1} parent=160 // pred_check_branch
          %693 = sbr.rel (%p691) target = $region181
        $region180: #{self_attention_forward.1} parent=160 // pred_region
          %v694 = vlaneseq
          %vm695 = vcmp.ge.s32.totalorder %v694, 0
          %vm696 = vcmp.lt.s32.totalorder %v694, 256
          %vm697 = vmand %vm695, %vm696
          %698 = vst.msk [vmem:[#allocation2] sm:$0x3] %vm697, -inf
          %699 = vst.msk [vmem:[#allocation3] sm:$0x3] %vm697, 0.0
          %700 = vst [vmem:[#allocation4] sm:$0xff] 0.0
          %701 = vst [vmem:[#allocation4 + $0x8] sm:$0xff] 0.0
          %702 = vst [vmem:[#allocation4 + $0x10] sm:$0xff] 0.0
          %703 = vst [vmem:[#allocation4 + $0x18] sm:$0xff] 0.0
          %704 = vst [vmem:[#allocation4 + $0x20] sm:$0xff] 0.0
          %705 = vst [vmem:[#allocation4 + $0x28] sm:$0xff] 0.0
          %706 = vst [vmem:[#allocation4 + $0x30] sm:$0xff] 0.0
          %707 = vst [vmem:[#allocation4 + $0x38] sm:$0xff] 0.0
          %708 = vst [vmem:[#allocation4 + $0x40] sm:$0xff] 0.0
          %709 = vst [vmem:[#allocation4 + $0x48] sm:$0xff] 0.0
          %710 = vst [vmem:[#allocation4 + $0x50] sm:$0xff] 0.0
          %711 = vst [vmem:[#allocation4 + $0x58] sm:$0xff] 0.0
          %712 = vst [vmem:[#allocation4 + $0x60] sm:$0xff] 0.0
          %713 = vst [vmem:[#allocation4 + $0x68] sm:$0xff] 0.0
          %714 = vst [vmem:[#allocation4 + $0x70] sm:$0xff] 0.0
          %715 = vst [vmem:[#allocation4 + $0x78] sm:$0xff] 0.0
          %716 = vst [vmem:[#allocation4 + $0x80] sm:$0xff] 0.0
          %717 = vst [vmem:[#allocation4 + $0x88] sm:$0xff] 0.0
          %718 = vst [vmem:[#allocation4 + $0x90] sm:$0xff] 0.0
          %719 = vst [vmem:[#allocation4 + $0x98] sm:$0xff] 0.0
          %720 = vst [vmem:[#allocation4 + $0xa0] sm:$0xff] 0.0
          %721 = vst [vmem:[#allocation4 + $0xa8] sm:$0xff] 0.0
          %722 = vst [vmem:[#allocation4 + $0xb0] sm:$0xff] 0.0
          %723 = vst [vmem:[#allocation4 + $0xb8] sm:$0xff] 0.0
          %724 = vst [vmem:[#allocation4 + $0xc0] sm:$0xff] 0.0
          %725 = vst [vmem:[#allocation4 + $0xc8] sm:$0xff] 0.0
          %726 = vst [vmem:[#allocation4 + $0xd0] sm:$0xff] 0.0
          %727 = vst [vmem:[#allocation4 + $0xd8] sm:$0xff] 0.0
          %728 = vst [vmem:[#allocation4 + $0xe0] sm:$0xff] 0.0
          %729 = vst [vmem:[#allocation4 + $0xe8] sm:$0xff] 0.0
          %730 = vst [vmem:[#allocation4 + $0xf0] sm:$0xff] 0.0
          %731 = vst [vmem:[#allocation4 + $0xf8] sm:$0xff] 0.0
        $region181: #{self_attention_forward.1} parent=160 // pred_fallthru
          _
        %v732 = vld [vmem:[%s634] sm:$0xff]
        %v733 = vld [vmem:[%s634 + $0x8] sm:$0xff]
        %v734 = vld [vmem:[%s634 + $0x10] sm:$0xff]
        %v735 = vld [vmem:[%s634 + $0x18] sm:$0xff]
        %v736 = vld [vmem:[%s634 + $0x20] sm:$0xff]
        %v737 = vld [vmem:[%s634 + $0x28] sm:$0xff]
        %v738 = vld [vmem:[%s634 + $0x30] sm:$0xff]
        %v739 = vld [vmem:[%s634 + $0x38] sm:$0xff]
        %v740 = vld [vmem:[%s634 + $0x40] sm:$0xff]
        %v741 = vld [vmem:[%s634 + $0x48] sm:$0xff]
        %v742 = vld [vmem:[%s634 + $0x50] sm:$0xff]
        %v743 = vld [vmem:[%s634 + $0x58] sm:$0xff]
        %v744 = vld [vmem:[%s634 + $0x60] sm:$0xff]
        %v745 = vld [vmem:[%s634 + $0x68] sm:$0xff]
        %v746 = vld [vmem:[%s634 + $0x70] sm:$0xff]
        %v747 = vld [vmem:[%s634 + $0x78] sm:$0xff]
        %v748 = vld [vmem:[%s627] sm:$0xff]
        %v749 = vld [vmem:[%s627 + $0x8] sm:$0xff]
        %v750 = vld [vmem:[%s627 + $0x10] sm:$0xff]
        %v751 = vld [vmem:[%s627 + $0x18] sm:$0xff]
        %v752 = vld [vmem:[%s627 + $0x20] sm:$0xff]
        %v753 = vld [vmem:[%s627 + $0x28] sm:$0xff]
        %v754 = vld [vmem:[%s627 + $0x30] sm:$0xff]
        %v755 = vld [vmem:[%s627 + $0x38] sm:$0xff]
        %v756 = vld [vmem:[%s627 + $0x40] sm:$0xff]
        %v757 = vld [vmem:[%s627 + $0x48] sm:$0xff]
        %v758 = vld [vmem:[%s627 + $0x50] sm:$0xff]
        %v759 = vld [vmem:[%s627 + $0x58] sm:$0xff]
        %v760 = vld [vmem:[%s627 + $0x60] sm:$0xff]
        %v761 = vld [vmem:[%s627 + $0x68] sm:$0xff]
        %v762 = vld [vmem:[%s627 + $0x70] sm:$0xff]
        %v763 = vld [vmem:[%s627 + $0x78] sm:$0xff]
        %v780 = vunpack.c.l.b16 %v732
        %v781 = vunpack.c.h.b16 %v732
        %v782 = vunpack.c.l.b16 %v733
        %v783 = vunpack.c.h.b16 %v733
        %v784 = vunpack.c.l.b16 %v734
        %v785 = vunpack.c.h.b16 %v734
        %v786 = vunpack.c.l.b16 %v735
        %v787 = vunpack.c.h.b16 %v735
        %v788 = vunpack.c.l.b16 %v736
        %v789 = vunpack.c.h.b16 %v736
        %v790 = vunpack.c.l.b16 %v737
        %v791 = vunpack.c.h.b16 %v737
        %v792 = vunpack.c.l.b16 %v738
        %v793 = vunpack.c.h.b16 %v738
        %v794 = vunpack.c.l.b16 %v739
        %v795 = vunpack.c.h.b16 %v739
        %v796 = vunpack.c.l.b16 %v740
        %v797 = vunpack.c.h.b16 %v740
        %v798 = vunpack.c.l.b16 %v741
        %v799 = vunpack.c.h.b16 %v741
        %v800 = vunpack.c.l.b16 %v742
        %v801 = vunpack.c.h.b16 %v742
        %v802 = vunpack.c.l.b16 %v743
        %v803 = vunpack.c.h.b16 %v743
        %v804 = vunpack.c.l.b16 %v744
        %v805 = vunpack.c.h.b16 %v744
        %v806 = vunpack.c.l.b16 %v745
        %v807 = vunpack.c.h.b16 %v745
        %v808 = vunpack.c.l.b16 %v746
        %v809 = vunpack.c.h.b16 %v746
        %v810 = vunpack.c.l.b16 %v747
        %v811 = vunpack.c.h.b16 %v747
        %v812 = vpack.c.b16 %v782, %v780
        %v813 = vpack.c.b16 %v783, %v781
        %v814 = vpack.c.b16 %v786, %v784
        %v815 = vpack.c.b16 %v787, %v785
        %v816 = vpack.c.b16 %v790, %v788
        %v817 = vpack.c.b16 %v791, %v789
        %v818 = vpack.c.b16 %v794, %v792
        %v819 = vpack.c.b16 %v795, %v793
        %v820 = vpack.c.b16 %v798, %v796
        %v821 = vpack.c.b16 %v799, %v797
        %v822 = vpack.c.b16 %v802, %v800
        %v823 = vpack.c.b16 %v803, %v801
        %v824 = vpack.c.b16 %v806, %v804
        %v825 = vpack.c.b16 %v807, %v805
        %v826 = vpack.c.b16 %v810, %v808
        %v827 = vpack.c.b16 %v811, %v809
        %844 = vxpose.xlu0.c.b16.start [1/8] %v812, 128
        %845 = vxpose.xlu0.c.b16.cont [2/8] %v814, 128
        %846 = vxpose.xlu0.c.b16.cont [3/8] %v816, 128
        %847 = vxpose.xlu0.c.b16.cont [4/8] %v818, 128
        %848 = vxpose.xlu0.c.b16.cont [5/8] %v820, 128
        %849 = vxpose.xlu0.c.b16.cont [6/8] %v822, 128
        %850 = vxpose.xlu0.c.b16.cont [7/8] %v824, 128
        %851 = vxpose.xlu0.c.b16.end [8/8] %v826, 128
        %v852 = vpop.trf.xlu0
        %v853 = vpop.trf.xlu0
        %v854 = vpop.trf.xlu0
        %v855 = vpop.trf.xlu0
        %v856 = vpop.trf.xlu0
        %v857 = vpop.trf.xlu0
        %v858 = vpop.trf.xlu0
        %v859 = vpop.trf.xlu0
        %860 = vxpose.xlu0.c.b16.start [1/8] %v813, 128
        %861 = vxpose.xlu0.c.b16.cont [2/8] %v815, 128
        %862 = vxpose.xlu0.c.b16.cont [3/8] %v817, 128
        %863 = vxpose.xlu0.c.b16.cont [4/8] %v819, 128
        %864 = vxpose.xlu0.c.b16.cont [5/8] %v821, 128
        %865 = vxpose.xlu0.c.b16.cont [6/8] %v823, 128
        %866 = vxpose.xlu0.c.b16.cont [7/8] %v825, 128
        %867 = vxpose.xlu0.c.b16.end [8/8] %v827, 128
        %v868 = vpop.trf.xlu0
        %v869 = vpop.trf.xlu0
        %v870 = vpop.trf.xlu0
        %v871 = vpop.trf.xlu0
        %v872 = vpop.trf.xlu0
        %v873 = vpop.trf.xlu0
        %v874 = vpop.trf.xlu0
        %v875 = vpop.trf.xlu0
        %v892 = vunpack.c.l.b16 %v748
        %v893 = vunpack.c.h.b16 %v748
        %v894 = vunpack.c.l.b16 %v749
        %v895 = vunpack.c.h.b16 %v749
        %v896 = vunpack.c.l.b16 %v750
        %v897 = vunpack.c.h.b16 %v750
        %v898 = vunpack.c.l.b16 %v751
        %v899 = vunpack.c.h.b16 %v751
        %v900 = vunpack.c.l.b16 %v752
        %v901 = vunpack.c.h.b16 %v752
        %v902 = vunpack.c.l.b16 %v753
        %v903 = vunpack.c.h.b16 %v753
        %v904 = vunpack.c.l.b16 %v754
        %v905 = vunpack.c.h.b16 %v754
        %v906 = vunpack.c.l.b16 %v755
        %v907 = vunpack.c.h.b16 %v755
        %v908 = vunpack.c.l.b16 %v756
        %v909 = vunpack.c.h.b16 %v756
        %v910 = vunpack.c.l.b16 %v757
        %v911 = vunpack.c.h.b16 %v757
        %v912 = vunpack.c.l.b16 %v758
        %v913 = vunpack.c.h.b16 %v758
        %v914 = vunpack.c.l.b16 %v759
        %v915 = vunpack.c.h.b16 %v759
        %v916 = vunpack.c.l.b16 %v760
        %v917 = vunpack.c.h.b16 %v760
        %v918 = vunpack.c.l.b16 %v761
        %v919 = vunpack.c.h.b16 %v761
        %v920 = vunpack.c.l.b16 %v762
        %v921 = vunpack.c.h.b16 %v762
        %v922 = vunpack.c.l.b16 %v763
        %v923 = vunpack.c.h.b16 %v763
        %v924 = vpack.c.b16 %v894, %v892
        %v925 = vpack.c.b16 %v895, %v893
        %v926 = vpack.c.b16 %v898, %v896
        %v927 = vpack.c.b16 %v899, %v897
        %v928 = vpack.c.b16 %v902, %v900
        %v929 = vpack.c.b16 %v903, %v901
        %v930 = vpack.c.b16 %v906, %v904
        %v931 = vpack.c.b16 %v907, %v905
        %v932 = vpack.c.b16 %v910, %v908
        %v933 = vpack.c.b16 %v911, %v909
        %v934 = vpack.c.b16 %v914, %v912
        %v935 = vpack.c.b16 %v915, %v913
        %v936 = vpack.c.b16 %v918, %v916
        %v937 = vpack.c.b16 %v919, %v917
        %v938 = vpack.c.b16 %v922, %v920
        %v939 = vpack.c.b16 %v923, %v921
        %956 = vmatprep.subr.bf16.mxu0 %v925
        %957 = vmatpush1.bf16.msra.mxu0 %v924
        %958 = vmatprep.subr.bf16.mxu0 %v927
        %959 = vmatpush1.bf16.msra.mxu0 %v926
        %960 = vmatprep.subr.bf16.mxu0 %v929
        %961 = vmatpush1.bf16.msra.mxu0 %v928
        %962 = vmatprep.subr.bf16.mxu0 %v931
        %963 = vmatpush1.bf16.msra.mxu0 %v930
        %964 = vmatprep.subr.bf16.mxu0 %v933
        %965 = vmatpush1.bf16.msra.mxu0 %v932
        %966 = vmatprep.subr.bf16.mxu0 %v935
        %967 = vmatpush1.bf16.msra.mxu0 %v934
        %968 = vmatprep.subr.bf16.mxu0 %v937
        %969 = vmatpush1.bf16.msra.mxu0 %v936
        %970 = vmatprep.subr.bf16.mxu0 %v939
        %971 = vmatpush1.bf16.msra.mxu0 %v938
        %972 = vmatprep.subr.bf16.mxu0 0
        %973 = vmatpush1.bf16.msra.mxu0 0
        %974 = vmatprep.subr.bf16.mxu0 0
        %975 = vmatpush1.bf16.msra.mxu0 0
        %976 = vmatprep.subr.bf16.mxu0 0
        %977 = vmatpush1.bf16.msra.mxu0 0
        %978 = vmatprep.subr.bf16.mxu0 0
        %979 = vmatpush1.bf16.msra.mxu0 0
        %980 = vmatprep.subr.bf16.mxu0 0
        %981 = vmatpush1.bf16.msra.mxu0 0
        %982 = vmatprep.subr.bf16.mxu0 0
        %983 = vmatpush1.bf16.msra.mxu0 0
        %984 = vmatprep.subr.bf16.mxu0 0
        %985 = vmatpush1.bf16.msra.mxu0 0
        %986 = vmatprep.subr.bf16.mxu0 0
        %987 = vmatpush1.bf16.msra.mxu0 0
        %988 = vmatprep.mubr.bf16.mxu0 0
        %989 = vmatmul.mubr.bf16.gmra.mrb[0].mxu0 %v852
        %v990 = vpop.f32.mrb[0].mxu0
        %v991 = vadd.f32 0.0, %v990
        %v992 = vpop.f32.mrb[0].mxu0
        %v993 = vadd.f32 0.0, %v992
        %v994 = vpop.f32.mrb[0].mxu0
        %v995 = vadd.f32 0.0, %v994
        %v996 = vpop.f32.mrb[0].mxu0
        %v997 = vadd.f32 0.0, %v996
        %998 = vmatprep.mubr.bf16.mxu0 0
        %999 = vmatmul.mubr.bf16.gmra.mrb[0].mxu0 %v853
        %v1000 = vpop.f32.mrb[0].mxu0
        %v1001 = vadd.f32 0.0, %v1000
        %v1002 = vpop.f32.mrb[0].mxu0
        %v1003 = vadd.f32 0.0, %v1002
        %v1004 = vpop.f32.mrb[0].mxu0
        %v1005 = vadd.f32 0.0, %v1004
        %v1006 = vpop.f32.mrb[0].mxu0
        %v1007 = vadd.f32 0.0, %v1006
        %1008 = vmatprep.mubr.bf16.mxu0 0
        %1009 = vmatmul.mubr.bf16.gmra.mrb[0].mxu0 %v854
        %v1010 = vpop.f32.mrb[0].mxu0
        %v1011 = vadd.f32 0.0, %v1010
        %v1012 = vpop.f32.mrb[0].mxu0
        %v1013 = vadd.f32 0.0, %v1012
        %v1014 = vpop.f32.mrb[0].mxu0
        %v1015 = vadd.f32 0.0, %v1014
        %v1016 = vpop.f32.mrb[0].mxu0
        %v1017 = vadd.f32 0.0, %v1016
        %1018 = vmatprep.mubr.bf16.mxu0 0
        %1019 = vmatmul.mubr.bf16.gmra.mrb[0].mxu0 %v855
        %v1020 = vpop.f32.mrb[0].mxu0
        %v1021 = vadd.f32 0.0, %v1020
        %v1022 = vpop.f32.mrb[0].mxu0
        %v1023 = vadd.f32 0.0, %v1022
        %v1024 = vpop.f32.mrb[0].mxu0
        %v1025 = vadd.f32 0.0, %v1024
        %v1026 = vpop.f32.mrb[0].mxu0
        %v1027 = vadd.f32 0.0, %v1026
        %1028 = vmatprep.mubr.bf16.mxu0 0
        %1029 = vmatmul.mubr.bf16.gmra.mrb[0].mxu0 %v856
        %v1030 = vpop.f32.mrb[0].mxu0
        %v1031 = vadd.f32 0.0, %v1030
        %v1032 = vpop.f32.mrb[0].mxu0
        %v1033 = vadd.f32 0.0, %v1032
        %v1034 = vpop.f32.mrb[0].mxu0
        %v1035 = vadd.f32 0.0, %v1034
        %v1036 = vpop.f32.mrb[0].mxu0
        %v1037 = vadd.f32 0.0, %v1036
        %1038 = vmatprep.mubr.bf16.mxu0 0
        %1039 = vmatmul.mubr.bf16.gmra.mrb[0].mxu0 %v857
        %v1040 = vpop.f32.mrb[0].mxu0
        %v1041 = vadd.f32 0.0, %v1040
        %v1042 = vpop.f32.mrb[0].mxu0
        %v1043 = vadd.f32 0.0, %v1042
        %v1044 = vpop.f32.mrb[0].mxu0
        %v1045 = vadd.f32 0.0, %v1044
        %v1046 = vpop.f32.mrb[0].mxu0
        %v1047 = vadd.f32 0.0, %v1046
        %1048 = vmatprep.mubr.bf16.mxu0 0
        %1049 = vmatmul.mubr.bf16.gmra.mrb[0].mxu0 %v858
        %v1050 = vpop.f32.mrb[0].mxu0
        %v1051 = vadd.f32 0.0, %v1050
        %v1052 = vpop.f32.mrb[0].mxu0
        %v1053 = vadd.f32 0.0, %v1052
        %v1054 = vpop.f32.mrb[0].mxu0
        %v1055 = vadd.f32 0.0, %v1054
        %v1056 = vpop.f32.mrb[0].mxu0
        %v1057 = vadd.f32 0.0, %v1056
        %1058 = vmatprep.mubr.bf16.mxu0 0
        %1059 = vmatmul.mubr.bf16.gmra.mrb[0].mxu0 %v859
        %v1060 = vpop.f32.mrb[0].mxu0
        %v1061 = vadd.f32 0.0, %v1060
        %v1062 = vpop.f32.mrb[0].mxu0
        %v1063 = vadd.f32 0.0, %v1062
        %v1064 = vpop.f32.mrb[0].mxu0
        %v1065 = vadd.f32 0.0, %v1064
        %v1066 = vpop.f32.mrb[0].mxu0
        %v1067 = vadd.f32 0.0, %v1066
        %1068 = vmatprep.mubr.bf16.mxu0 0
        %1069 = vmatmul.mubr.bf16.gmra.mrb[0].mxu0 %v868
        %v1070 = vpop.f32.mrb[0].mxu0
        %v1071 = vadd.f32 0.0, %v1070
        %v1072 = vpop.f32.mrb[0].mxu0
        %v1073 = vadd.f32 0.0, %v1072
        %v1074 = vpop.f32.mrb[0].mxu0
        %v1075 = vadd.f32 0.0, %v1074
        %v1076 = vpop.f32.mrb[0].mxu0
        %v1077 = vadd.f32 0.0, %v1076
        %1078 = vmatprep.mubr.bf16.mxu0 0
        %1079 = vmatmul.mubr.bf16.gmra.mrb[0].mxu0 %v869
        %v1080 = vpop.f32.mrb[0].mxu0
        %v1081 = vadd.f32 0.0, %v1080
        %v1082 = vpop.f32.mrb[0].mxu0
        %v1083 = vadd.f32 0.0, %v1082
        %v1084 = vpop.f32.mrb[0].mxu0
        %v1085 = vadd.f32 0.0, %v1084
        %v1086 = vpop.f32.mrb[0].mxu0
        %v1087 = vadd.f32 0.0, %v1086
        %1088 = vmatprep.mubr.bf16.mxu0 0
        %1089 = vmatmul.mubr.bf16.gmra.mrb[0].mxu0 %v870
        %v1090 = vpop.f32.mrb[0].mxu0
        %v1091 = vadd.f32 0.0, %v1090
        %v1092 = vpop.f32.mrb[0].mxu0
        %v1093 = vadd.f32 0.0, %v1092
        %v1094 = vpop.f32.mrb[0].mxu0
        %v1095 = vadd.f32 0.0, %v1094
        %v1096 = vpop.f32.mrb[0].mxu0
        %v1097 = vadd.f32 0.0, %v1096
        %1098 = vmatprep.mubr.bf16.mxu0 0
        %1099 = vmatmul.mubr.bf16.gmra.mrb[0].mxu0 %v871
        %v1100 = vpop.f32.mrb[0].mxu0
        %v1101 = vadd.f32 0.0, %v1100
        %v1102 = vpop.f32.mrb[0].mxu0
        %v1103 = vadd.f32 0.0, %v1102
        %v1104 = vpop.f32.mrb[0].mxu0
        %v1105 = vadd.f32 0.0, %v1104
        %v1106 = vpop.f32.mrb[0].mxu0
        %v1107 = vadd.f32 0.0, %v1106
        %1108 = vmatprep.mubr.bf16.mxu0 0
        %1109 = vmatmul.mubr.bf16.gmra.mrb[0].mxu0 %v872
        %v1110 = vpop.f32.mrb[0].mxu0
        %v1111 = vadd.f32 0.0, %v1110
        %v1112 = vpop.f32.mrb[0].mxu0
        %v1113 = vadd.f32 0.0, %v1112
        %v1114 = vpop.f32.mrb[0].mxu0
        %v1115 = vadd.f32 0.0, %v1114
        %v1116 = vpop.f32.mrb[0].mxu0
        %v1117 = vadd.f32 0.0, %v1116
        %1118 = vmatprep.mubr.bf16.mxu0 0
        %1119 = vmatmul.mubr.bf16.gmra.mrb[0].mxu0 %v873
        %v1120 = vpop.f32.mrb[0].mxu0
        %v1121 = vadd.f32 0.0, %v1120
        %v1122 = vpop.f32.mrb[0].mxu0
        %v1123 = vadd.f32 0.0, %v1122
        %v1124 = vpop.f32.mrb[0].mxu0
        %v1125 = vadd.f32 0.0, %v1124
        %v1126 = vpop.f32.mrb[0].mxu0
        %v1127 = vadd.f32 0.0, %v1126
        %1128 = vmatprep.mubr.bf16.mxu0 0
        %1129 = vmatmul.mubr.bf16.gmra.mrb[0].mxu0 %v874
        %v1130 = vpop.f32.mrb[0].mxu0
        %v1131 = vadd.f32 0.0, %v1130
        %v1132 = vpop.f32.mrb[0].mxu0
        %v1133 = vadd.f32 0.0, %v1132
        %v1134 = vpop.f32.mrb[0].mxu0
        %v1135 = vadd.f32 0.0, %v1134
        %v1136 = vpop.f32.mrb[0].mxu0
        %v1137 = vadd.f32 0.0, %v1136
        %1138 = vmatprep.mubr.bf16.mxu0 0
        %1139 = vmatmul.mubr.bf16.gmra.mrb[0].mxu0 %v875
        %v1140 = vpop.f32.mrb[0].mxu0
        %v1141 = vadd.f32 0.0, %v1140
        %v1142 = vpop.f32.mrb[0].mxu0
        %v1143 = vadd.f32 0.0, %v1142
        %v1144 = vpop.f32.mrb[0].mxu0
        %v1145 = vadd.f32 0.0, %v1144
        %v1146 = vpop.f32.mrb[0].mxu0
        %v1147 = vadd.f32 0.0, %v1146
        %1148 = vdwg.mxu0
        %v1149 = vld [vmem:[#allocation2] sm:$0x3]
        %v1150 = vmax.f32 %v991, %v1001
        %v1151 = vmax.f32 %v995, %v1005
        %v1152 = vmax.f32 %v1150, %v1011
        %v1153 = vmax.f32 %v1151, %v1015
        %v1154 = vmax.f32 %v1152, %v1021
        %v1155 = vmax.f32 %v1153, %v1025
        %v1156 = vmax.f32 %v1154, %v1031
        %v1157 = vmax.f32 %v1155, %v1035
        %v1158 = vmax.f32 %v1156, %v1041
        %v1159 = vmax.f32 %v1157, %v1045
        %v1160 = vmax.f32 %v1158, %v1051
        %v1161 = vmax.f32 %v1159, %v1055
        %v1162 = vmax.f32 %v1160, %v1061
        %v1163 = vmax.f32 %v1161, %v1065
        %v1164 = vmax.f32 %v1162, %v1071
        %v1165 = vmax.f32 %v1163, %v1075
        %v1166 = vmax.f32 %v1164, %v1081
        %v1167 = vmax.f32 %v1165, %v1085
        %v1168 = vmax.f32 %v1166, %v1091
        %v1169 = vmax.f32 %v1167, %v1095
        %v1170 = vmax.f32 %v1168, %v1101
        %v1171 = vmax.f32 %v1169, %v1105
        %v1172 = vmax.f32 %v1170, %v1111
        %v1173 = vmax.f32 %v1171, %v1115
        %v1174 = vmax.f32 %v1172, %v1121
        %v1175 = vmax.f32 %v1173, %v1125
        %v1176 = vmax.f32 %v1174, %v1131
        %v1177 = vmax.f32 %v1175, %v1135
        %v1178 = vmax.f32 %v1176, %v1141
        %v1179 = vmax.f32 %v1177, %v1145
        %v1180 = vmax.f32 %v1178, %v1179
        %v1181 = vrot.slane %v1180, 4
        %v1182 = vmax.f32 %v1180, %v1181
        %v1183 = vrot.slane %v1182, 2
        %v1184 = vmax.f32 %v1182, %v1183
        %v1185 = vrot.slane %v1184, 1
        %v1186 = vmax.f32 %v1184, %v1185
        %v1187 = vmax.f32 %v993, %v1003
        %v1188 = vmax.f32 %v997, %v1007
        %v1189 = vmax.f32 %v1187, %v1013
        %v1190 = vmax.f32 %v1188, %v1017
        %v1191 = vmax.f32 %v1189, %v1023
        %v1192 = vmax.f32 %v1190, %v1027
        %v1193 = vmax.f32 %v1191, %v1033
        %v1194 = vmax.f32 %v1192, %v1037
        %v1195 = vmax.f32 %v1193, %v1043
        %v1196 = vmax.f32 %v1194, %v1047
        %v1197 = vmax.f32 %v1195, %v1053
        %v1198 = vmax.f32 %v1196, %v1057
        %v1199 = vmax.f32 %v1197, %v1063
        %v1200 = vmax.f32 %v1198, %v1067
        %v1201 = vmax.f32 %v1199, %v1073
        %v1202 = vmax.f32 %v1200, %v1077
        %v1203 = vmax.f32 %v1201, %v1083
        %v1204 = vmax.f32 %v1202, %v1087
        %v1205 = vmax.f32 %v1203, %v1093
        %v1206 = vmax.f32 %v1204, %v1097
        %v1207 = vmax.f32 %v1205, %v1103
        %v1208 = vmax.f32 %v1206, %v1107
        %v1209 = vmax.f32 %v1207, %v1113
        %v1210 = vmax.f32 %v1208, %v1117
        %v1211 = vmax.f32 %v1209, %v1123
        %v1212 = vmax.f32 %v1210, %v1127
        %v1213 = vmax.f32 %v1211, %v1133
        %v1214 = vmax.f32 %v1212, %v1137
        %v1215 = vmax.f32 %v1213, %v1143
        %v1216 = vmax.f32 %v1214, %v1147
        %v1217 = vmax.f32 %v1215, %v1216
        %v1218 = vrot.slane %v1217, 4
        %v1219 = vmax.f32 %v1217, %v1218
        %v1220 = vrot.slane %v1219, 2
        %v1221 = vmax.f32 %v1219, %v1220
        %v1222 = vrot.slane %v1221, 1
        %v1223 = vmax.f32 %v1221, %v1222
        %v1226 = vcombine.low %v1186, %v1223
        %v1228 = vunpack.c.l.s4 1966171168
        %v1229 = vunpack.c.0.s8 %v1228
        %v1230 = vlaneseq
        %v1231 = vshrl.u32 %v1230, 7
        %v1232 = vsub.s32 %v1229, %v1231
        %v1233 = vrot.slane %v1226, %v1232
        %v1235 = vunpack.c.l.s4 1966171168
        %v1236 = vunpack.c.0.s8 %v1235
        %v1237 = vlaneseq
        %v1238 = vshrl.u32 %v1237, 7
        %v1239 = vsub.s32 %v1236, %v1238
        %v1240 = vrot.slane %v1233, %v1239
        %v1242 = vmax.f32 %v1149, %v1240
        %v1243 = vsub.f32 %v1149, %v1242
        %v1244 = vmul.f32 %v1243, 1.442695
        %v1245 = vpow.pop %v1244
        %v1247 = vlaneseq
        %v1248 = vshrl.u32 %v1247, 7
        %v1249 = vsub.s32 0, %v1248
        %v1250 = vrot.slane %v1242, %v1249
        %v1251 = vlaneseq
        %v1252 = vshrl.u32 %v1251, 7
        %v1253 = vsub.s32 1, %v1252
        %v1254 = vrot.slane %v1242, %v1253
        %v1257 = vsub.f32 %v991, %v1250
        %v1258 = vsub.f32 %v993, %v1254
        %v1259 = vsub.f32 %v995, %v1250
        %v1260 = vsub.f32 %v997, %v1254
        %v1261 = vsub.f32 %v1001, %v1250
        %v1262 = vsub.f32 %v1003, %v1254
        %v1263 = vsub.f32 %v1005, %v1250
        %v1264 = vsub.f32 %v1007, %v1254
        %v1265 = vsub.f32 %v1011, %v1250
        %v1266 = vsub.f32 %v1013, %v1254
        %v1267 = vsub.f32 %v1015, %v1250
        %v1268 = vsub.f32 %v1017, %v1254
        %v1269 = vsub.f32 %v1021, %v1250
        %v1270 = vsub.f32 %v1023, %v1254
        %v1271 = vsub.f32 %v1025, %v1250
        %v1272 = vsub.f32 %v1027, %v1254
        %v1273 = vsub.f32 %v1031, %v1250
        %v1274 = vsub.f32 %v1033, %v1254
        %v1275 = vsub.f32 %v1035, %v1250
        %v1276 = vsub.f32 %v1037, %v1254
        %v1277 = vsub.f32 %v1041, %v1250
        %v1278 = vsub.f32 %v1043, %v1254
        %v1279 = vsub.f32 %v1045, %v1250
        %v1280 = vsub.f32 %v1047, %v1254
        %v1281 = vsub.f32 %v1051, %v1250
        %v1282 = vsub.f32 %v1053, %v1254
        %v1283 = vsub.f32 %v1055, %v1250
        %v1284 = vsub.f32 %v1057, %v1254
        %v1285 = vsub.f32 %v1061, %v1250
        %v1286 = vsub.f32 %v1063, %v1254
        %v1287 = vsub.f32 %v1065, %v1250
        %v1288 = vsub.f32 %v1067, %v1254
        %v1289 = vsub.f32 %v1071, %v1250
        %v1290 = vsub.f32 %v1073, %v1254
        %v1291 = vsub.f32 %v1075, %v1250
        %v1292 = vsub.f32 %v1077, %v1254
        %v1293 = vsub.f32 %v1081, %v1250
        %v1294 = vsub.f32 %v1083, %v1254
        %v1295 = vsub.f32 %v1085, %v1250
        %v1296 = vsub.f32 %v1087, %v1254
        %v1297 = vsub.f32 %v1091, %v1250
        %v1298 = vsub.f32 %v1093, %v1254
        %v1299 = vsub.f32 %v1095, %v1250
        %v1300 = vsub.f32 %v1097, %v1254
        %v1301 = vsub.f32 %v1101, %v1250
        %v1302 = vsub.f32 %v1103, %v1254
        %v1303 = vsub.f32 %v1105, %v1250
        %v1304 = vsub.f32 %v1107, %v1254
        %v1305 = vsub.f32 %v1111, %v1250
        %v1306 = vsub.f32 %v1113, %v1254
        %v1307 = vsub.f32 %v1115, %v1250
        %v1308 = vsub.f32 %v1117, %v1254
        %v1309 = vsub.f32 %v1121, %v1250
        %v1310 = vsub.f32 %v1123, %v1254
        %v1311 = vsub.f32 %v1125, %v1250
        %v1312 = vsub.f32 %v1127, %v1254
        %v1313 = vsub.f32 %v1131, %v1250
        %v1314 = vsub.f32 %v1133, %v1254
        %v1315 = vsub.f32 %v1135, %v1250
        %v1316 = vsub.f32 %v1137, %v1254
        %v1317 = vsub.f32 %v1141, %v1250
        %v1318 = vsub.f32 %v1143, %v1254
        %v1319 = vsub.f32 %v1145, %v1250
        %v1320 = vsub.f32 %v1147, %v1254
        %v1321 = vmul.f32 %v1257, 1.442695
        %v1322 = vpow.pop %v1321
        %v1323 = vmul.f32 %v1258, 1.442695
        %v1324 = vpow.pop %v1323
        %v1325 = vmul.f32 %v1259, 1.442695
        %v1326 = vpow.pop %v1325
        %v1327 = vmul.f32 %v1260, 1.442695
        %v1328 = vpow.pop %v1327
        %v1329 = vmul.f32 %v1261, 1.442695
        %v1330 = vpow.pop %v1329
        %v1331 = vmul.f32 %v1262, 1.442695
        %v1332 = vpow.pop %v1331
        %v1333 = vmul.f32 %v1263, 1.442695
        %v1334 = vpow.pop %v1333
        %v1335 = vmul.f32 %v1264, 1.442695
        %v1336 = vpow.pop %v1335
        %v1337 = vmul.f32 %v1265, 1.442695
        %v1338 = vpow.pop %v1337
        %v1339 = vmul.f32 %v1266, 1.442695
        %v1340 = vpow.pop %v1339
        %v1341 = vmul.f32 %v1267, 1.442695
        %v1342 = vpow.pop %v1341
        %v1343 = vmul.f32 %v1268, 1.442695
        %v1344 = vpow.pop %v1343
        %v1345 = vmul.f32 %v1269, 1.442695
        %v1346 = vpow.pop %v1345
        %v1347 = vmul.f32 %v1270, 1.442695
        %v1348 = vpow.pop %v1347
        %v1349 = vmul.f32 %v1271, 1.442695
        %v1350 = vpow.pop %v1349
        %v1351 = vmul.f32 %v1272, 1.442695
        %v1352 = vpow.pop %v1351
        %v1353 = vmul.f32 %v1273, 1.442695
        %v1354 = vpow.pop %v1353
        %v1355 = vmul.f32 %v1274, 1.442695
        %v1356 = vpow.pop %v1355
        %v1357 = vmul.f32 %v1275, 1.442695
        %v1358 = vpow.pop %v1357
        %v1359 = vmul.f32 %v1276, 1.442695
        %v1360 = vpow.pop %v1359
        %v1361 = vmul.f32 %v1277, 1.442695
        %v1362 = vpow.pop %v1361
        %v1363 = vmul.f32 %v1278, 1.442695
        %v1364 = vpow.pop %v1363
        %v1365 = vmul.f32 %v1279, 1.442695
        %v1366 = vpow.pop %v1365
        %v1367 = vmul.f32 %v1280, 1.442695
        %v1368 = vpow.pop %v1367
        %v1369 = vmul.f32 %v1281, 1.442695
        %v1370 = vpow.pop %v1369
        %v1371 = vmul.f32 %v1282, 1.442695
        %v1372 = vpow.pop %v1371
        %v1373 = vmul.f32 %v1283, 1.442695
        %v1374 = vpow.pop %v1373
        %v1375 = vmul.f32 %v1284, 1.442695
        %v1376 = vpow.pop %v1375
        %v1377 = vmul.f32 %v1285, 1.442695
        %v1378 = vpow.pop %v1377
        %v1379 = vmul.f32 %v1286, 1.442695
        %v1380 = vpow.pop %v1379
        %v1381 = vmul.f32 %v1287, 1.442695
        %v1382 = vpow.pop %v1381
        %v1383 = vmul.f32 %v1288, 1.442695
        %v1384 = vpow.pop %v1383
        %v1385 = vmul.f32 %v1289, 1.442695
        %v1386 = vpow.pop %v1385
        %v1387 = vmul.f32 %v1290, 1.442695
        %v1388 = vpow.pop %v1387
        %v1389 = vmul.f32 %v1291, 1.442695
        %v1390 = vpow.pop %v1389
        %v1391 = vmul.f32 %v1292, 1.442695
        %v1392 = vpow.pop %v1391
        %v1393 = vmul.f32 %v1293, 1.442695
        %v1394 = vpow.pop %v1393
        %v1395 = vmul.f32 %v1294, 1.442695
        %v1396 = vpow.pop %v1395
        %v1397 = vmul.f32 %v1295, 1.442695
        %v1398 = vpow.pop %v1397
        %v1399 = vmul.f32 %v1296, 1.442695
        %v1400 = vpow.pop %v1399
        %v1401 = vmul.f32 %v1297, 1.442695
        %v1402 = vpow.pop %v1401
        %v1403 = vmul.f32 %v1298, 1.442695
        %v1404 = vpow.pop %v1403
        %v1405 = vmul.f32 %v1299, 1.442695
        %v1406 = vpow.pop %v1405
        %v1407 = vmul.f32 %v1300, 1.442695
        %v1408 = vpow.pop %v1407
        %v1409 = vmul.f32 %v1301, 1.442695
        %v1410 = vpow.pop %v1409
        %v1411 = vmul.f32 %v1302, 1.442695
        %v1412 = vpow.pop %v1411
        %v1413 = vmul.f32 %v1303, 1.442695
        %v1414 = vpow.pop %v1413
        %v1415 = vmul.f32 %v1304, 1.442695
        %v1416 = vpow.pop %v1415
        %v1417 = vmul.f32 %v1305, 1.442695
        %v1418 = vpow.pop %v1417
        %v1419 = vmul.f32 %v1306, 1.442695
        %v1420 = vpow.pop %v1419
        %v1421 = vmul.f32 %v1307, 1.442695
        %v1422 = vpow.pop %v1421
        %v1423 = vmul.f32 %v1308, 1.442695
        %v1424 = vpow.pop %v1423
        %v1425 = vmul.f32 %v1309, 1.442695
        %v1426 = vpow.pop %v1425
        %v1427 = vmul.f32 %v1310, 1.442695
        %v1428 = vpow.pop %v1427
        %v1429 = vmul.f32 %v1311, 1.442695
        %v1430 = vpow.pop %v1429
        %v1431 = vmul.f32 %v1312, 1.442695
        %v1432 = vpow.pop %v1431
        %v1433 = vmul.f32 %v1313, 1.442695
        %v1434 = vpow.pop %v1433
        %v1435 = vmul.f32 %v1314, 1.442695
        %v1436 = vpow.pop %v1435
        %v1437 = vmul.f32 %v1315, 1.442695
        %v1438 = vpow.pop %v1437
        %v1439 = vmul.f32 %v1316, 1.442695
        %v1440 = vpow.pop %v1439
        %v1441 = vmul.f32 %v1317, 1.442695
        %v1442 = vpow.pop %v1441
        %v1443 = vmul.f32 %v1318, 1.442695
        %v1444 = vpow.pop %v1443
        %v1445 = vmul.f32 %v1319, 1.442695
        %v1446 = vpow.pop %v1445
        %v1447 = vmul.f32 %v1320, 1.442695
        %v1448 = vpow.pop %v1447
        %v1449 = vld [vmem:[#allocation3] sm:$0x3]
        %v1450 = vmul.f32 %v1245, %v1449
        %v1451 = vadd.f32 %v1322, %v1326
        %v1452 = vadd.f32 %v1451, %v1330
        %v1453 = vadd.f32 %v1452, %v1334
        %v1454 = vadd.f32 %v1453, %v1338
        %v1455 = vadd.f32 %v1454, %v1342
        %v1456 = vadd.f32 %v1455, %v1346
        %v1457 = vadd.f32 %v1456, %v1350
        %v1458 = vadd.f32 %v1457, %v1354
        %v1459 = vadd.f32 %v1458, %v1358
        %v1460 = vadd.f32 %v1459, %v1362
        %v1461 = vadd.f32 %v1460, %v1366
        %v1462 = vadd.f32 %v1461, %v1370
        %v1463 = vadd.f32 %v1462, %v1374
        %v1464 = vadd.f32 %v1463, %v1378
        %v1465 = vadd.f32 %v1464, %v1382
        %v1466 = vadd.f32 %v1465, %v1386
        %v1467 = vadd.f32 %v1466, %v1390
        %v1468 = vadd.f32 %v1467, %v1394
        %v1469 = vadd.f32 %v1468, %v1398
        %v1470 = vadd.f32 %v1469, %v1402
        %v1471 = vadd.f32 %v1470, %v1406
        %v1472 = vadd.f32 %v1471, %v1410
        %v1473 = vadd.f32 %v1472, %v1414
        %v1474 = vadd.f32 %v1473, %v1418
        %v1475 = vadd.f32 %v1474, %v1422
        %v1476 = vadd.f32 %v1475, %v1426
        %v1477 = vadd.f32 %v1476, %v1430
        %v1478 = vadd.f32 %v1477, %v1434
        %v1479 = vadd.f32 %v1478, %v1438
        %v1480 = vadd.f32 %v1479, %v1442
        %v1481 = vadd.f32 %v1480, %v1446
        %v1482 = vrot.slane %v1481, 4
        %v1483 = vadd.f32 %v1481, %v1482
        %v1484 = vrot.slane %v1483, 2
        %v1485 = vadd.f32 %v1483, %v1484
        %v1486 = vrot.slane %v1485, 1
        %v1487 = vadd.f32 %v1485, %v1486
        %v1488 = vadd.f32 %v1324, %v1328
        %v1489 = vadd.f32 %v1488, %v1332
        %v1490 = vadd.f32 %v1489, %v1336
        %v1491 = vadd.f32 %v1490, %v1340
        %v1492 = vadd.f32 %v1491, %v1344
        %v1493 = vadd.f32 %v1492, %v1348
        %v1494 = vadd.f32 %v1493, %v1352
        %v1495 = vadd.f32 %v1494, %v1356
        %v1496 = vadd.f32 %v1495, %v1360
        %v1497 = vadd.f32 %v1496, %v1364
        %v1498 = vadd.f32 %v1497, %v1368
        %v1499 = vadd.f32 %v1498, %v1372
        %v1500 = vadd.f32 %v1499, %v1376
        %v1501 = vadd.f32 %v1500, %v1380
        %v1502 = vadd.f32 %v1501, %v1384
        %v1503 = vadd.f32 %v1502, %v1388
        %v1504 = vadd.f32 %v1503, %v1392
        %v1505 = vadd.f32 %v1504, %v1396
        %v1506 = vadd.f32 %v1505, %v1400
        %v1507 = vadd.f32 %v1506, %v1404
        %v1508 = vadd.f32 %v1507, %v1408
        %v1509 = vadd.f32 %v1508, %v1412
        %v1510 = vadd.f32 %v1509, %v1416
        %v1511 = vadd.f32 %v1510, %v1420
        %v1512 = vadd.f32 %v1511, %v1424
        %v1513 = vadd.f32 %v1512, %v1428
        %v1514 = vadd.f32 %v1513, %v1432
        %v1515 = vadd.f32 %v1514, %v1436
        %v1516 = vadd.f32 %v1515, %v1440
        %v1517 = vadd.f32 %v1516, %v1444
        %v1518 = vadd.f32 %v1517, %v1448
        %v1519 = vrot.slane %v1518, 4
        %v1520 = vadd.f32 %v1518, %v1519
        %v1521 = vrot.slane %v1520, 2
        %v1522 = vadd.f32 %v1520, %v1521
        %v1523 = vrot.slane %v1522, 1
        %v1524 = vadd.f32 %v1522, %v1523
        %v1527 = vcombine.low %v1487, %v1524
        %v1529 = vunpack.c.l.s4 1966171168
        %v1530 = vunpack.c.0.s8 %v1529
        %v1531 = vlaneseq
        %v1532 = vshrl.u32 %v1531, 7
        %v1533 = vsub.s32 %v1530, %v1532
        %v1534 = vrot.slane %v1527, %v1533
        %v1536 = vunpack.c.l.s4 1966171168
        %v1537 = vunpack.c.0.s8 %v1536
        %v1538 = vlaneseq
        %v1539 = vshrl.u32 %v1538, 7
        %v1540 = vsub.s32 %v1537, %v1539
        %v1541 = vrot.slane %v1534, %v1540
        %v1543 = vadd.f32 %v1450, %v1541
        %v1544 = vlaneseq
        %vm1545 = vcmp.ge.s32.totalorder %v1544, 0
        %vm1546 = vcmp.lt.s32.totalorder %v1544, 256
        %vm1547 = vmand %vm1545, %vm1546
        %1548 = vst.msk [vmem:[#allocation3] sm:$0x3] %vm1547, %v1543
        %1549 = vst.msk [vmem:[#allocation2] sm:$0x3] %vm1547, %v1242
        %v1550 = vld [vmem:[#allocation4] sm:$0xff]
        %v1551 = vld [vmem:[#allocation4 + $0x8] sm:$0xff]
        %v1552 = vld [vmem:[#allocation4 + $0x10] sm:$0xff]
        %v1553 = vld [vmem:[#allocation4 + $0x18] sm:$0xff]
        %v1554 = vld [vmem:[#allocation4 + $0x20] sm:$0xff]
        %v1555 = vld [vmem:[#allocation4 + $0x28] sm:$0xff]
        %v1556 = vld [vmem:[#allocation4 + $0x30] sm:$0xff]
        %v1557 = vld [vmem:[#allocation4 + $0x38] sm:$0xff]
        %v1558 = vld [vmem:[#allocation4 + $0x40] sm:$0xff]
        %v1559 = vld [vmem:[#allocation4 + $0x48] sm:$0xff]
        %v1560 = vld [vmem:[#allocation4 + $0x50] sm:$0xff]
        %v1561 = vld [vmem:[#allocation4 + $0x58] sm:$0xff]
        %v1562 = vld [vmem:[#allocation4 + $0x60] sm:$0xff]
        %v1563 = vld [vmem:[#allocation4 + $0x68] sm:$0xff]
        %v1564 = vld [vmem:[#allocation4 + $0x70] sm:$0xff]
        %v1565 = vld [vmem:[#allocation4 + $0x78] sm:$0xff]
        %v1566 = vld [vmem:[#allocation4 + $0x80] sm:$0xff]
        %v1567 = vld [vmem:[#allocation4 + $0x88] sm:$0xff]
        %v1568 = vld [vmem:[#allocation4 + $0x90] sm:$0xff]
        %v1569 = vld [vmem:[#allocation4 + $0x98] sm:$0xff]
        %v1570 = vld [vmem:[#allocation4 + $0xa0] sm:$0xff]
        %v1571 = vld [vmem:[#allocation4 + $0xa8] sm:$0xff]
        %v1572 = vld [vmem:[#allocation4 + $0xb0] sm:$0xff]
        %v1573 = vld [vmem:[#allocation4 + $0xb8] sm:$0xff]
        %v1574 = vld [vmem:[#allocation4 + $0xc0] sm:$0xff]
        %v1575 = vld [vmem:[#allocation4 + $0xc8] sm:$0xff]
        %v1576 = vld [vmem:[#allocation4 + $0xd0] sm:$0xff]
        %v1577 = vld [vmem:[#allocation4 + $0xd8] sm:$0xff]
        %v1578 = vld [vmem:[#allocation4 + $0xe0] sm:$0xff]
        %v1579 = vld [vmem:[#allocation4 + $0xe8] sm:$0xff]
        %v1580 = vld [vmem:[#allocation4 + $0xf0] sm:$0xff]
        %v1581 = vld [vmem:[#allocation4 + $0xf8] sm:$0xff]
        %v1583 = vlaneseq
        %v1584 = vshrl.u32 %v1583, 7
        %v1585 = vsub.s32 0, %v1584
        %v1586 = vrot.slane %v1245, %v1585
        %v1587 = vlaneseq
        %v1588 = vshrl.u32 %v1587, 7
        %v1589 = vsub.s32 1, %v1588
        %v1590 = vrot.slane %v1245, %v1589
        %v1593 = vmul.f32 %v1586, %v1550
        %v1594 = vmul.f32 %v1590, %v1551
        %v1595 = vmul.f32 %v1586, %v1552
        %v1596 = vmul.f32 %v1590, %v1553
        %v1597 = vmul.f32 %v1586, %v1554
        %v1598 = vmul.f32 %v1590, %v1555
        %v1599 = vmul.f32 %v1586, %v1556
        %v1600 = vmul.f32 %v1590, %v1557
        %v1601 = vmul.f32 %v1586, %v1558
        %v1602 = vmul.f32 %v1590, %v1559
        %v1603 = vmul.f32 %v1586, %v1560
        %v1604 = vmul.f32 %v1590, %v1561
        %v1605 = vmul.f32 %v1586, %v1562
        %v1606 = vmul.f32 %v1590, %v1563
        %v1607 = vmul.f32 %v1586, %v1564
        %v1608 = vmul.f32 %v1590, %v1565
        %v1609 = vmul.f32 %v1586, %v1566
        %v1610 = vmul.f32 %v1590, %v1567
        %v1611 = vmul.f32 %v1586, %v1568
        %v1612 = vmul.f32 %v1590, %v1569
        %v1613 = vmul.f32 %v1586, %v1570
        %v1614 = vmul.f32 %v1590, %v1571
        %v1615 = vmul.f32 %v1586, %v1572
        %v1616 = vmul.f32 %v1590, %v1573
        %v1617 = vmul.f32 %v1586, %v1574
        %v1618 = vmul.f32 %v1590, %v1575
        %v1619 = vmul.f32 %v1586, %v1576
        %v1620 = vmul.f32 %v1590, %v1577
        %v1621 = vmul.f32 %v1586, %v1578
        %v1622 = vmul.f32 %v1590, %v1579
        %v1623 = vmul.f32 %v1586, %v1580
        %v1624 = vmul.f32 %v1590, %v1581
        %v1625 = vld [vmem:[%s641] sm:$0xff]
        %v1626 = vld [vmem:[%s641 + $0x8] sm:$0xff]
        %v1627 = vld [vmem:[%s641 + $0x10] sm:$0xff]
        %v1628 = vld [vmem:[%s641 + $0x18] sm:$0xff]
        %v1629 = vld [vmem:[%s641 + $0x20] sm:$0xff]
        %v1630 = vld [vmem:[%s641 + $0x28] sm:$0xff]
        %v1631 = vld [vmem:[%s641 + $0x30] sm:$0xff]
        %v1632 = vld [vmem:[%s641 + $0x38] sm:$0xff]
        %v1633 = vld [vmem:[%s641 + $0x40] sm:$0xff]
        %v1634 = vld [vmem:[%s641 + $0x48] sm:$0xff]
        %v1635 = vld [vmem:[%s641 + $0x50] sm:$0xff]
        %v1636 = vld [vmem:[%s641 + $0x58] sm:$0xff]
        %v1637 = vld [vmem:[%s641 + $0x60] sm:$0xff]
        %v1638 = vld [vmem:[%s641 + $0x68] sm:$0xff]
        %v1639 = vld [vmem:[%s641 + $0x70] sm:$0xff]
        %v1640 = vld [vmem:[%s641 + $0x78] sm:$0xff]
        %v1641 = vpack.c.bf16 %v1326, %v1322
        %v1642 = vpack.c.bf16 %v1328, %v1324
        %v1643 = vpack.c.bf16 %v1334, %v1330
        %v1644 = vpack.c.bf16 %v1336, %v1332
        %v1645 = vpack.c.bf16 %v1342, %v1338
        %v1646 = vpack.c.bf16 %v1344, %v1340
        %v1647 = vpack.c.bf16 %v1350, %v1346
        %v1648 = vpack.c.bf16 %v1352, %v1348
        %v1649 = vpack.c.bf16 %v1358, %v1354
        %v1650 = vpack.c.bf16 %v1360, %v1356
        %v1651 = vpack.c.bf16 %v1366, %v1362
        %v1652 = vpack.c.bf16 %v1368, %v1364
        %v1653 = vpack.c.bf16 %v1374, %v1370
        %v1654 = vpack.c.bf16 %v1376, %v1372
        %v1655 = vpack.c.bf16 %v1382, %v1378
        %v1656 = vpack.c.bf16 %v1384, %v1380
        %v1657 = vpack.c.bf16 %v1390, %v1386
        %v1658 = vpack.c.bf16 %v1392, %v1388
        %v1659 = vpack.c.bf16 %v1398, %v1394
        %v1660 = vpack.c.bf16 %v1400, %v1396
        %v1661 = vpack.c.bf16 %v1406, %v1402
        %v1662 = vpack.c.bf16 %v1408, %v1404
        %v1663 = vpack.c.bf16 %v1414, %v1410
        %v1664 = vpack.c.bf16 %v1416, %v1412
        %v1665 = vpack.c.bf16 %v1422, %v1418
        %v1666 = vpack.c.bf16 %v1424, %v1420
        %v1667 = vpack.c.bf16 %v1430, %v1426
        %v1668 = vpack.c.bf16 %v1432, %v1428
        %v1669 = vpack.c.bf16 %v1438, %v1434
        %v1670 = vpack.c.bf16 %v1440, %v1436
        %v1671 = vpack.c.bf16 %v1446, %v1442
        %v1672 = vpack.c.bf16 %v1448, %v1444
        %v1689 = vunpack.c.l.b16 %v1625
        %v1690 = vunpack.c.h.b16 %v1625
        %v1691 = vunpack.c.l.b16 %v1626
        %v1692 = vunpack.c.h.b16 %v1626
        %v1693 = vunpack.c.l.b16 %v1627
        %v1694 = vunpack.c.h.b16 %v1627
        %v1695 = vunpack.c.l.b16 %v1628
        %v1696 = vunpack.c.h.b16 %v1628
        %v1697 = vunpack.c.l.b16 %v1629
        %v1698 = vunpack.c.h.b16 %v1629
        %v1699 = vunpack.c.l.b16 %v1630
        %v1700 = vunpack.c.h.b16 %v1630
        %v1701 = vunpack.c.l.b16 %v1631
        %v1702 = vunpack.c.h.b16 %v1631
        %v1703 = vunpack.c.l.b16 %v1632
        %v1704 = vunpack.c.h.b16 %v1632
        %v1705 = vunpack.c.l.b16 %v1633
        %v1706 = vunpack.c.h.b16 %v1633
        %v1707 = vunpack.c.l.b16 %v1634
        %v1708 = vunpack.c.h.b16 %v1634
        %v1709 = vunpack.c.l.b16 %v1635
        %v1710 = vunpack.c.h.b16 %v1635
        %v1711 = vunpack.c.l.b16 %v1636
        %v1712 = vunpack.c.h.b16 %v1636
        %v1713 = vunpack.c.l.b16 %v1637
        %v1714 = vunpack.c.h.b16 %v1637
        %v1715 = vunpack.c.l.b16 %v1638
        %v1716 = vunpack.c.h.b16 %v1638
        %v1717 = vunpack.c.l.b16 %v1639
        %v1718 = vunpack.c.h.b16 %v1639
        %v1719 = vunpack.c.l.b16 %v1640
        %v1720 = vunpack.c.h.b16 %v1640
        %v1721 = vpack.c.b16 %v1691, %v1689
        %v1722 = vpack.c.b16 %v1692, %v1690
        %v1723 = vpack.c.b16 %v1695, %v1693
        %v1724 = vpack.c.b16 %v1696, %v1694
        %v1725 = vpack.c.b16 %v1699, %v1697
        %v1726 = vpack.c.b16 %v1700, %v1698
        %v1727 = vpack.c.b16 %v1703, %v1701
        %v1728 = vpack.c.b16 %v1704, %v1702
        %v1729 = vpack.c.b16 %v1707, %v1705
        %v1730 = vpack.c.b16 %v1708, %v1706
        %v1731 = vpack.c.b16 %v1711, %v1709
        %v1732 = vpack.c.b16 %v1712, %v1710
        %v1733 = vpack.c.b16 %v1715, %v1713
        %v1734 = vpack.c.b16 %v1716, %v1714
        %v1735 = vpack.c.b16 %v1719, %v1717
        %v1736 = vpack.c.b16 %v1720, %v1718
        %1753 = vmatprep.subr.bf16.mxu0 %v1642
        %1754 = vmatpush1.bf16.msra.mxu0 %v1641
        %1755 = vmatprep.subr.bf16.mxu0 %v1644
        %1756 = vmatpush1.bf16.msra.mxu0 %v1643
        %1757 = vmatprep.subr.bf16.mxu0 %v1646
        %1758 = vmatpush1.bf16.msra.mxu0 %v1645
        %1759 = vmatprep.subr.bf16.mxu0 %v1648
        %1760 = vmatpush1.bf16.msra.mxu0 %v1647
        %1761 = vmatprep.subr.bf16.mxu0 %v1650
        %1762 = vmatpush1.bf16.msra.mxu0 %v1649
        %1763 = vmatprep.subr.bf16.mxu0 %v1652
        %1764 = vmatpush1.bf16.msra.mxu0 %v1651
        %1765 = vmatprep.subr.bf16.mxu0 %v1654
        %1766 = vmatpush1.bf16.msra.mxu0 %v1653
        %1767 = vmatprep.subr.bf16.mxu0 %v1656
        %1768 = vmatpush1.bf16.msra.mxu0 %v1655
        %1769 = vmatprep.subr.bf16.mxu0 %v1658
        %1770 = vmatpush1.bf16.msra.mxu0 %v1657
        %1771 = vmatprep.subr.bf16.mxu0 %v1660
        %1772 = vmatpush1.bf16.msra.mxu0 %v1659
        %1773 = vmatprep.subr.bf16.mxu0 %v1662
        %1774 = vmatpush1.bf16.msra.mxu0 %v1661
        %1775 = vmatprep.subr.bf16.mxu0 %v1664
        %1776 = vmatpush1.bf16.msra.mxu0 %v1663
        %1777 = vmatprep.subr.bf16.mxu0 %v1666
        %1778 = vmatpush1.bf16.msra.mxu0 %v1665
        %1779 = vmatprep.subr.bf16.mxu0 %v1668
        %1780 = vmatpush1.bf16.msra.mxu0 %v1667
        %1781 = vmatprep.subr.bf16.mxu0 %v1670
        %1782 = vmatpush1.bf16.msra.mxu0 %v1669
        %1783 = vmatprep.subr.bf16.mxu0 %v1672
        %1784 = vmatpush1.bf16.msra.mxu0 %v1671
        %1785 = vmatprep.mubr.bf16.mxu0 %v1722
        %1786 = vmatmul.mubr.bf16.gmra.mrb[0].mxu0 %v1721
        %v1787 = vpop.f32.mrb[0].mxu0
        %v1788 = vadd.f32 0.0, %v1787
        %v1789 = vpop.f32.mrb[0].mxu0
        %v1790 = vadd.f32 0.0, %v1789
        %v1791 = vpop.f32.mrb[0].mxu0
        %v1792 = vadd.f32 0.0, %v1791
        %v1793 = vpop.f32.mrb[0].mxu0
        %v1794 = vadd.f32 0.0, %v1793
        %1795 = vmatprep.mubr.bf16.mxu0 %v1724
        %1796 = vmatmul.mubr.bf16.gmra.mrb[0].mxu0 %v1723
        %v1797 = vpop.f32.mrb[0].mxu0
        %v1798 = vadd.f32 0.0, %v1797
        %v1799 = vpop.f32.mrb[0].mxu0
        %v1800 = vadd.f32 0.0, %v1799
        %v1801 = vpop.f32.mrb[0].mxu0
        %v1802 = vadd.f32 0.0, %v1801
        %v1803 = vpop.f32.mrb[0].mxu0
        %v1804 = vadd.f32 0.0, %v1803
        %1805 = vmatprep.mubr.bf16.mxu0 %v1726
        %1806 = vmatmul.mubr.bf16.gmra.mrb[0].mxu0 %v1725
        %v1807 = vpop.f32.mrb[0].mxu0
        %v1808 = vadd.f32 0.0, %v1807
        %v1809 = vpop.f32.mrb[0].mxu0
        %v1810 = vadd.f32 0.0, %v1809
        %v1811 = vpop.f32.mrb[0].mxu0
        %v1812 = vadd.f32 0.0, %v1811
        %v1813 = vpop.f32.mrb[0].mxu0
        %v1814 = vadd.f32 0.0, %v1813
        %1815 = vmatprep.mubr.bf16.mxu0 %v1728
        %1816 = vmatmul.mubr.bf16.gmra.mrb[0].mxu0 %v1727
        %v1817 = vpop.f32.mrb[0].mxu0
        %v1818 = vadd.f32 0.0, %v1817
        %v1819 = vpop.f32.mrb[0].mxu0
        %v1820 = vadd.f32 0.0, %v1819
        %v1821 = vpop.f32.mrb[0].mxu0
        %v1822 = vadd.f32 0.0, %v1821
        %v1823 = vpop.f32.mrb[0].mxu0
        %v1824 = vadd.f32 0.0, %v1823
        %1825 = vmatprep.mubr.bf16.mxu0 %v1730
        %1826 = vmatmul.mubr.bf16.gmra.mrb[0].mxu0 %v1729
        %v1827 = vpop.f32.mrb[0].mxu0
        %v1828 = vadd.f32 0.0, %v1827
        %v1829 = vpop.f32.mrb[0].mxu0
        %v1830 = vadd.f32 0.0, %v1829
        %v1831 = vpop.f32.mrb[0].mxu0
        %v1832 = vadd.f32 0.0, %v1831
        %v1833 = vpop.f32.mrb[0].mxu0
        %v1834 = vadd.f32 0.0, %v1833
        %1835 = vmatprep.mubr.bf16.mxu0 %v1732
        %1836 = vmatmul.mubr.bf16.gmra.mrb[0].mxu0 %v1731
        %v1837 = vpop.f32.mrb[0].mxu0
        %v1838 = vadd.f32 0.0, %v1837
        %v1839 = vpop.f32.mrb[0].mxu0
        %v1840 = vadd.f32 0.0, %v1839
        %v1841 = vpop.f32.mrb[0].mxu0
        %v1842 = vadd.f32 0.0, %v1841
        %v1843 = vpop.f32.mrb[0].mxu0
        %v1844 = vadd.f32 0.0, %v1843
        %1845 = vmatprep.mubr.bf16.mxu0 %v1734
        %1846 = vmatmul.mubr.bf16.gmra.mrb[0].mxu0 %v1733
        %v1847 = vpop.f32.mrb[0].mxu0
        %v1848 = vadd.f32 0.0, %v1847
        %v1849 = vpop.f32.mrb[0].mxu0
        %v1850 = vadd.f32 0.0, %v1849
        %v1851 = vpop.f32.mrb[0].mxu0
        %v1852 = vadd.f32 0.0, %v1851
        %v1853 = vpop.f32.mrb[0].mxu0
        %v1854 = vadd.f32 0.0, %v1853
        %1855 = vmatprep.mubr.bf16.mxu0 %v1736
        %1856 = vmatmul.mubr.bf16.gmra.mrb[0].mxu0 %v1735
        %v1857 = vpop.f32.mrb[0].mxu0
        %v1858 = vadd.f32 0.0, %v1857
        %v1859 = vpop.f32.mrb[0].mxu0
        %v1860 = vadd.f32 0.0, %v1859
        %v1861 = vpop.f32.mrb[0].mxu0
        %v1862 = vadd.f32 0.0, %v1861
        %v1863 = vpop.f32.mrb[0].mxu0
        %v1864 = vadd.f32 0.0, %v1863
        %1865 = vdwg.mxu0
        %v1866 = vadd.f32 %v1593, %v1788
        %v1867 = vadd.f32 %v1594, %v1790
        %v1868 = vadd.f32 %v1595, %v1792
        %v1869 = vadd.f32 %v1596, %v1794
        %v1870 = vadd.f32 %v1597, %v1798
        %v1871 = vadd.f32 %v1598, %v1800
        %v1872 = vadd.f32 %v1599, %v1802
        %v1873 = vadd.f32 %v1600, %v1804
        %v1874 = vadd.f32 %v1601, %v1808
        %v1875 = vadd.f32 %v1602, %v1810
        %v1876 = vadd.f32 %v1603, %v1812
        %v1877 = vadd.f32 %v1604, %v1814
        %v1878 = vadd.f32 %v1605, %v1818
        %v1879 = vadd.f32 %v1606, %v1820
        %v1880 = vadd.f32 %v1607, %v1822
        %v1881 = vadd.f32 %v1608, %v1824
        %v1882 = vadd.f32 %v1609, %v1828
        %v1883 = vadd.f32 %v1610, %v1830
        %v1884 = vadd.f32 %v1611, %v1832
        %v1885 = vadd.f32 %v1612, %v1834
        %v1886 = vadd.f32 %v1613, %v1838
        %v1887 = vadd.f32 %v1614, %v1840
        %v1888 = vadd.f32 %v1615, %v1842
        %v1889 = vadd.f32 %v1616, %v1844
        %v1890 = vadd.f32 %v1617, %v1848
        %v1891 = vadd.f32 %v1618, %v1850
        %v1892 = vadd.f32 %v1619, %v1852
        %v1893 = vadd.f32 %v1620, %v1854
        %v1894 = vadd.f32 %v1621, %v1858
        %v1895 = vadd.f32 %v1622, %v1860
        %v1896 = vadd.f32 %v1623, %v1862
        %v1897 = vadd.f32 %v1624, %v1864
        %1898 = vst [vmem:[#allocation4] sm:$0xff] %v1866
        %1899 = vst [vmem:[#allocation4 + $0x8] sm:$0xff] %v1867
        %1900 = vst [vmem:[#allocation4 + $0x10] sm:$0xff] %v1868
        %1901 = vst [vmem:[#allocation4 + $0x18] sm:$0xff] %v1869
        %1902 = vst [vmem:[#allocation4 + $0x20] sm:$0xff] %v1870
        %1903 = vst [vmem:[#allocation4 + $0x28] sm:$0xff] %v1871
        %1904 = vst [vmem:[#allocation4 + $0x30] sm:$0xff] %v1872
        %1905 = vst [vmem:[#allocation4 + $0x38] sm:$0xff] %v1873
        %1906 = vst [vmem:[#allocation4 + $0x40] sm:$0xff] %v1874
        %1907 = vst [vmem:[#allocation4 + $0x48] sm:$0xff] %v1875
        %1908 = vst [vmem:[#allocation4 + $0x50] sm:$0xff] %v1876
        %1909 = vst [vmem:[#allocation4 + $0x58] sm:$0xff] %v1877
        %1910 = vst [vmem:[#allocation4 + $0x60] sm:$0xff] %v1878
        %1911 = vst [vmem:[#allocation4 + $0x68] sm:$0xff] %v1879
        %1912 = vst [vmem:[#allocation4 + $0x70] sm:$0xff] %v1880
        %1913 = vst [vmem:[#allocation4 + $0x78] sm:$0xff] %v1881
        %1914 = vst [vmem:[#allocation4 + $0x80] sm:$0xff] %v1882
        %1915 = vst [vmem:[#allocation4 + $0x88] sm:$0xff] %v1883
        %1916 = vst [vmem:[#allocation4 + $0x90] sm:$0xff] %v1884
        %1917 = vst [vmem:[#allocation4 + $0x98] sm:$0xff] %v1885
        %1918 = vst [vmem:[#allocation4 + $0xa0] sm:$0xff] %v1886
        %1919 = vst [vmem:[#allocation4 + $0xa8] sm:$0xff] %v1887
        %1920 = vst [vmem:[#allocation4 + $0xb0] sm:$0xff] %v1888
        %1921 = vst [vmem:[#allocation4 + $0xb8] sm:$0xff] %v1889
        %1922 = vst [vmem:[#allocation4 + $0xc0] sm:$0xff] %v1890
        %1923 = vst [vmem:[#allocation4 + $0xc8] sm:$0xff] %v1891
        %1924 = vst [vmem:[#allocation4 + $0xd0] sm:$0xff] %v1892
        %1925 = vst [vmem:[#allocation4 + $0xd8] sm:$0xff] %v1893
        %1926 = vst [vmem:[#allocation4 + $0xe0] sm:$0xff] %v1894
        %1927 = vst [vmem:[#allocation4 + $0xe8] sm:$0xff] %v1895
        %1928 = vst [vmem:[#allocation4 + $0xf0] sm:$0xff] %v1896
        %1929 = vst [vmem:[#allocation4 + $0xf8] sm:$0xff] %v1897
        %p1930 = scmp.eq.s32.totalorder %s24, 1
        // Predicated region
        $region182: #{self_attention_forward.1} parent=160 // pred_check
          %p1931 = pneg %p1930
        $region183: #{self_attention_forward.1} parent=160 // pred_check_branch
          %1933 = sbr.rel (%p1931) target = $region185
        $region184: #{self_attention_forward.1} parent=160 // pred_region
          %v1934 = vld [vmem:[#allocation3] sm:$0x3]
          %v1935 = vrcp.pop %v1934
          %s1936 = sld [smem:[#allocation5]]
          %v1937 = vld [vmem:[#allocation4] sm:$0xff]
          %v1938 = vld [vmem:[#allocation4 + $0x8] sm:$0xff]
          %v1939 = vld [vmem:[#allocation4 + $0x10] sm:$0xff]
          %v1940 = vld [vmem:[#allocation4 + $0x18] sm:$0xff]
          %v1941 = vld [vmem:[#allocation4 + $0x20] sm:$0xff]
          %v1942 = vld [vmem:[#allocation4 + $0x28] sm:$0xff]
          %v1943 = vld [vmem:[#allocation4 + $0x30] sm:$0xff]
          %v1944 = vld [vmem:[#allocation4 + $0x38] sm:$0xff]
          %v1945 = vld [vmem:[#allocation4 + $0x40] sm:$0xff]
          %v1946 = vld [vmem:[#allocation4 + $0x48] sm:$0xff]
          %v1947 = vld [vmem:[#allocation4 + $0x50] sm:$0xff]
          %v1948 = vld [vmem:[#allocation4 + $0x58] sm:$0xff]
          %v1949 = vld [vmem:[#allocation4 + $0x60] sm:$0xff]
          %v1950 = vld [vmem:[#allocation4 + $0x68] sm:$0xff]
          %v1951 = vld [vmem:[#allocation4 + $0x70] sm:$0xff]
          %v1952 = vld [vmem:[#allocation4 + $0x78] sm:$0xff]
          %v1953 = vld [vmem:[#allocation4 + $0x80] sm:$0xff]
          %v1954 = vld [vmem:[#allocation4 + $0x88] sm:$0xff]
          %v1955 = vld [vmem:[#allocation4 + $0x90] sm:$0xff]
          %v1956 = vld [vmem:[#allocation4 + $0x98] sm:$0xff]
          %v1957 = vld [vmem:[#allocation4 + $0xa0] sm:$0xff]
          %v1958 = vld [vmem:[#allocation4 + $0xa8] sm:$0xff]
          %v1959 = vld [vmem:[#allocation4 + $0xb0] sm:$0xff]
          %v1960 = vld [vmem:[#allocation4 + $0xb8] sm:$0xff]
          %v1961 = vld [vmem:[#allocation4 + $0xc0] sm:$0xff]
          %v1962 = vld [vmem:[#allocation4 + $0xc8] sm:$0xff]
          %v1963 = vld [vmem:[#allocation4 + $0xd0] sm:$0xff]
          %v1964 = vld [vmem:[#allocation4 + $0xd8] sm:$0xff]
          %v1965 = vld [vmem:[#allocation4 + $0xe0] sm:$0xff]
          %v1966 = vld [vmem:[#allocation4 + $0xe8] sm:$0xff]
          %v1967 = vld [vmem:[#allocation4 + $0xf0] sm:$0xff]
          %v1968 = vld [vmem:[#allocation4 + $0xf8] sm:$0xff]
          %v1970 = vlaneseq
          %v1971 = vshrl.u32 %v1970, 7
          %v1972 = vsub.s32 0, %v1971
          %v1973 = vrot.slane %v1935, %v1972
          %v1974 = vlaneseq
          %v1975 = vshrl.u32 %v1974, 7
          %v1976 = vsub.s32 1, %v1975
          %v1977 = vrot.slane %v1935, %v1976
          %v1980 = vmul.f32 %v1937, %v1973
          %v1981 = vmul.f32 %v1938, %v1977
          %v1982 = vmul.f32 %v1939, %v1973
          %v1983 = vmul.f32 %v1940, %v1977
          %v1984 = vmul.f32 %v1941, %v1973
          %v1985 = vmul.f32 %v1942, %v1977
          %v1986 = vmul.f32 %v1943, %v1973
          %v1987 = vmul.f32 %v1944, %v1977
          %v1988 = vmul.f32 %v1945, %v1973
          %v1989 = vmul.f32 %v1946, %v1977
          %v1990 = vmul.f32 %v1947, %v1973
          %v1991 = vmul.f32 %v1948, %v1977
          %v1992 = vmul.f32 %v1949, %v1973
          %v1993 = vmul.f32 %v1950, %v1977
          %v1994 = vmul.f32 %v1951, %v1973
          %v1995 = vmul.f32 %v1952, %v1977
          %v1996 = vmul.f32 %v1953, %v1973
          %v1997 = vmul.f32 %v1954, %v1977
          %v1998 = vmul.f32 %v1955, %v1973
          %v1999 = vmul.f32 %v1956, %v1977
          %v2000 = vmul.f32 %v1957, %v1973
          %v2001 = vmul.f32 %v1958, %v1977
          %v2002 = vmul.f32 %v1959, %v1973
          %v2003 = vmul.f32 %v1960, %v1977
          %v2004 = vmul.f32 %v1961, %v1973
          %v2005 = vmul.f32 %v1962, %v1977
          %v2006 = vmul.f32 %v1963, %v1973
          %v2007 = vmul.f32 %v1964, %v1977
          %v2008 = vmul.f32 %v1965, %v1973
          %v2009 = vmul.f32 %v1966, %v1977
          %v2010 = vmul.f32 %v1967, %v1973
          %v2011 = vmul.f32 %v1968, %v1977
          %v2012 = vstv %s1936
          %v2013 = vmul.f32 %v2012, %v1980
          %v2014 = vmul.f32 %v2012, %v1981
          %v2015 = vmul.f32 %v2012, %v1982
          %v2016 = vmul.f32 %v2012, %v1983
          %v2017 = vmul.f32 %v2012, %v1984
          %v2018 = vmul.f32 %v2012, %v1985
          %v2019 = vmul.f32 %v2012, %v1986
          %v2020 = vmul.f32 %v2012, %v1987
          %v2021 = vmul.f32 %v2012, %v1988
          %v2022 = vmul.f32 %v2012, %v1989
          %v2023 = vmul.f32 %v2012, %v1990
          %v2024 = vmul.f32 %v2012, %v1991
          %v2025 = vmul.f32 %v2012, %v1992
          %v2026 = vmul.f32 %v2012, %v1993
          %v2027 = vmul.f32 %v2012, %v1994
          %v2028 = vmul.f32 %v2012, %v1995
          %v2029 = vmul.f32 %v2012, %v1996
          %v2030 = vmul.f32 %v2012, %v1997
          %v2031 = vmul.f32 %v2012, %v1998
          %v2032 = vmul.f32 %v2012, %v1999
          %v2033 = vmul.f32 %v2012, %v2000
          %v2034 = vmul.f32 %v2012, %v2001
          %v2035 = vmul.f32 %v2012, %v2002
          %v2036 = vmul.f32 %v2012, %v2003
          %v2037 = vmul.f32 %v2012, %v2004
          %v2038 = vmul.f32 %v2012, %v2005
          %v2039 = vmul.f32 %v2012, %v2006
          %v2040 = vmul.f32 %v2012, %v2007
          %v2041 = vmul.f32 %v2012, %v2008
          %v2042 = vmul.f32 %v2012, %v2009
          %v2043 = vmul.f32 %v2012, %v2010
          %v2044 = vmul.f32 %v2012, %v2011
          %v2045 = vld [vmem:[%s648] sm:$0xff]
          %v2046 = vld [vmem:[%s648 + $0x8] sm:$0xff]
          %v2047 = vld [vmem:[%s648 + $0x10] sm:$0xff]
          %v2048 = vld [vmem:[%s648 + $0x18] sm:$0xff]
          %v2049 = vld [vmem:[%s648 + $0x20] sm:$0xff]
          %v2050 = vld [vmem:[%s648 + $0x28] sm:$0xff]
          %v2051 = vld [vmem:[%s648 + $0x30] sm:$0xff]
          %v2052 = vld [vmem:[%s648 + $0x38] sm:$0xff]
          %v2053 = vld [vmem:[%s648 + $0x40] sm:$0xff]
          %v2054 = vld [vmem:[%s648 + $0x48] sm:$0xff]
          %v2055 = vld [vmem:[%s648 + $0x50] sm:$0xff]
          %v2056 = vld [vmem:[%s648 + $0x58] sm:$0xff]
          %v2057 = vld [vmem:[%s648 + $0x60] sm:$0xff]
          %v2058 = vld [vmem:[%s648 + $0x68] sm:$0xff]
          %v2059 = vld [vmem:[%s648 + $0x70] sm:$0xff]
          %v2060 = vld [vmem:[%s648 + $0x78] sm:$0xff]
          %v2061 = vld [vmem:[%s648 + $0x80] sm:$0xff]
          %v2062 = vld [vmem:[%s648 + $0x88] sm:$0xff]
          %v2063 = vld [vmem:[%s648 + $0x90] sm:$0xff]
          %v2064 = vld [vmem:[%s648 + $0x98] sm:$0xff]
          %v2065 = vld [vmem:[%s648 + $0xa0] sm:$0xff]
          %v2066 = vld [vmem:[%s648 + $0xa8] sm:$0xff]
          %v2067 = vld [vmem:[%s648 + $0xb0] sm:$0xff]
          %v2068 = vld [vmem:[%s648 + $0xb8] sm:$0xff]
          %v2069 = vld [vmem:[%s648 + $0xc0] sm:$0xff]
          %v2070 = vld [vmem:[%s648 + $0xc8] sm:$0xff]
          %v2071 = vld [vmem:[%s648 + $0xd0] sm:$0xff]
          %v2072 = vld [vmem:[%s648 + $0xd8] sm:$0xff]
          %v2073 = vld [vmem:[%s648 + $0xe0] sm:$0xff]
          %v2074 = vld [vmem:[%s648 + $0xe8] sm:$0xff]
          %v2075 = vld [vmem:[%s648 + $0xf0] sm:$0xff]
          %v2076 = vld [vmem:[%s648 + $0xf8] sm:$0xff]
          %v2077 = vadd.f32 %v2013, %v2045
          %v2078 = vadd.f32 %v2014, %v2046
          %v2079 = vadd.f32 %v2015, %v2047
          %v2080 = vadd.f32 %v2016, %v2048
          %v2081 = vadd.f32 %v2017, %v2049
          %v2082 = vadd.f32 %v2018, %v2050
          %v2083 = vadd.f32 %v2019, %v2051
          %v2084 = vadd.f32 %v2020, %v2052
          %v2085 = vadd.f32 %v2021, %v2053
          %v2086 = vadd.f32 %v2022, %v2054
          %v2087 = vadd.f32 %v2023, %v2055
          %v2088 = vadd.f32 %v2024, %v2056
          %v2089 = vadd.f32 %v2025, %v2057
          %v2090 = vadd.f32 %v2026, %v2058
          %v2091 = vadd.f32 %v2027, %v2059
          %v2092 = vadd.f32 %v2028, %v2060
          %v2093 = vadd.f32 %v2029, %v2061
          %v2094 = vadd.f32 %v2030, %v2062
          %v2095 = vadd.f32 %v2031, %v2063
          %v2096 = vadd.f32 %v2032, %v2064
          %v2097 = vadd.f32 %v2033, %v2065
          %v2098 = vadd.f32 %v2034, %v2066
          %v2099 = vadd.f32 %v2035, %v2067
          %v2100 = vadd.f32 %v2036, %v2068
          %v2101 = vadd.f32 %v2037, %v2069
          %v2102 = vadd.f32 %v2038, %v2070
          %v2103 = vadd.f32 %v2039, %v2071
          %v2104 = vadd.f32 %v2040, %v2072
          %v2105 = vadd.f32 %v2041, %v2073
          %v2106 = vadd.f32 %v2042, %v2074
          %v2107 = vadd.f32 %v2043, %v2075
          %v2108 = vadd.f32 %v2044, %v2076
          %2109 = vst [vmem:[%s683] sm:$0xff] %v2077
          %2110 = vst [vmem:[%s683 + $0x8] sm:$0xff] %v2078
          %2111 = vst [vmem:[%s683 + $0x10] sm:$0xff] %v2079
          %2112 = vst [vmem:[%s683 + $0x18] sm:$0xff] %v2080
          %2113 = vst [vmem:[%s683 + $0x20] sm:$0xff] %v2081
          %2114 = vst [vmem:[%s683 + $0x28] sm:$0xff] %v2082
          %2115 = vst [vmem:[%s683 + $0x30] sm:$0xff] %v2083
          %2116 = vst [vmem:[%s683 + $0x38] sm:$0xff] %v2084
          %2117 = vst [vmem:[%s683 + $0x40] sm:$0xff] %v2085
          %2118 = vst [vmem:[%s683 + $0x48] sm:$0xff] %v2086
          %2119 = vst [vmem:[%s683 + $0x50] sm:$0xff] %v2087
          %2120 = vst [vmem:[%s683 + $0x58] sm:$0xff] %v2088
          %2121 = vst [vmem:[%s683 + $0x60] sm:$0xff] %v2089
          %2122 = vst [vmem:[%s683 + $0x68] sm:$0xff] %v2090
          %2123 = vst [vmem:[%s683 + $0x70] sm:$0xff] %v2091
          %2124 = vst [vmem:[%s683 + $0x78] sm:$0xff] %v2092
          %2125 = vst [vmem:[%s683 + $0x80] sm:$0xff] %v2093
          %2126 = vst [vmem:[%s683 + $0x88] sm:$0xff] %v2094
          %2127 = vst [vmem:[%s683 + $0x90] sm:$0xff] %v2095
          %2128 = vst [vmem:[%s683 + $0x98] sm:$0xff] %v2096
          %2129 = vst [vmem:[%s683 + $0xa0] sm:$0xff] %v2097
          %2130 = vst [vmem:[%s683 + $0xa8] sm:$0xff] %v2098
          %2131 = vst [vmem:[%s683 + $0xb0] sm:$0xff] %v2099
          %2132 = vst [vmem:[%s683 + $0xb8] sm:$0xff] %v2100
          %2133 = vst [vmem:[%s683 + $0xc0] sm:$0xff] %v2101
          %2134 = vst [vmem:[%s683 + $0xc8] sm:$0xff] %v2102
          %2135 = vst [vmem:[%s683 + $0xd0] sm:$0xff] %v2103
          %2136 = vst [vmem:[%s683 + $0xd8] sm:$0xff] %v2104
          %2137 = vst [vmem:[%s683 + $0xe0] sm:$0xff] %v2105
          %2138 = vst [vmem:[%s683 + $0xe8] sm:$0xff] %v2106
          %2139 = vst [vmem:[%s683 + $0xf0] sm:$0xff] %v2107
          %2140 = vst [vmem:[%s683 + $0xf8] sm:$0xff] %v2108
        $region185: #{self_attention_forward.1} parent=160 // pred_fallthru
          _
        %s2141 = sand.u32 %s179, 1
        %s2142 = sand.u32 %s179, 1
        %s2143 = smul.addr %s2142, 256
        %s2144 = scalar_lea.vmem [#allocation10], %s2143
        // Predicated region
        $region186: #{self_attention_forward.1} parent=160 // pred_check
          %p2145 = pneg %p189
        $region187: #{self_attention_forward.1} parent=160 // pred_check_branch
          %2147 = sbr.rel (%p2145) target = $region189
        $region188: #{self_attention_forward.1} parent=160 // pred_region
          %s2148 = smul.u32 2, %s23
          %s2149 = smul.addr %s22, 64
          %s2150 = sadd.s32 %s2148, %s2149
          %s2151 = smul.addr %s2150, 8
          %s2152 = scalar_lea.vmem %s5, %s2151
          // Predicated region
          $region190: #{self_attention_forward.1} parent=188 // pred_check
            _
          $region191: #{self_attention_forward.1} parent=188 // pred_check_branch
            %2154 = sbr.rel (0) target = $region193
          $region192: #{self_attention_forward.1} parent=188 // pred_region
            // Predicated region
            $region194: #{self_attention_forward.1} parent=192 // pred_check
              _
            $region195: #{self_attention_forward.1} parent=192 // pred_check_branch
              %2156 = sbr.rel (0) target = $region197
            $region196: #{self_attention_forward.1} parent=192 // pred_region
              loop: start=0, step=1, limit=1
              $region198: #{self_attention_forward.1} parent=196 // loop_pre_header
                _
              $region199: #{self_attention_forward.1} parent=196 // loop_header
                %s2158 = sphi 0, %s2162
                %p2159 = scmp.ge.s32.totalorder %s2158, 1
                %s2163 = sphi %s2144, %s2144
                %s2164 = sphi %s2152, %s2152
              $region200: #{self_attention_forward.1} parent=196 // loop_header_branch
                %2161 = sbr.rel (%p2159) target = $region204
              $region201: #{self_attention_forward.1} parent=196 // loop_body
                %v2165 = vld [vmem:[%s2163] sm:$0xff]
                %2166 = vst [vmem:[%s2164] sm:$0xff] %v2165
                %v2167 = vld [vmem:[%s2163 + $0x8] sm:$0xff]
                %2168 = vst [vmem:[%s2164 + $0x8] sm:$0xff] %v2167
                %v2169 = vld [vmem:[%s2163 + $0x10] sm:$0xff]
                %2170 = vst [vmem:[%s2164 + $0x20] sm:$0xff] %v2169
                %v2171 = vld [vmem:[%s2163 + $0x18] sm:$0xff]
                %2172 = vst [vmem:[%s2164 + $0x28] sm:$0xff] %v2171
                %v2173 = vld [vmem:[%s2163 + $0x20] sm:$0xff]
                %2174 = vst [vmem:[%s2164 + $0x40] sm:$0xff] %v2173
                %v2175 = vld [vmem:[%s2163 + $0x28] sm:$0xff]
                %2176 = vst [vmem:[%s2164 + $0x48] sm:$0xff] %v2175
                %v2177 = vld [vmem:[%s2163 + $0x30] sm:$0xff]
                %2178 = vst [vmem:[%s2164 + $0x60] sm:$0xff] %v2177
                %v2179 = vld [vmem:[%s2163 + $0x38] sm:$0xff]
                %2180 = vst [vmem:[%s2164 + $0x68] sm:$0xff] %v2179
                %v2181 = vld [vmem:[%s2163 + $0x40] sm:$0xff]
                %2182 = vst [vmem:[%s2164 + $0x80] sm:$0xff] %v2181
                %v2183 = vld [vmem:[%s2163 + $0x48] sm:$0xff]
                %2184 = vst [vmem:[%s2164 + $0x88] sm:$0xff] %v2183
                %v2185 = vld [vmem:[%s2163 + $0x50] sm:$0xff]
                %2186 = vst [vmem:[%s2164 + $0xa0] sm:$0xff] %v2185
                %v2187 = vld [vmem:[%s2163 + $0x58] sm:$0xff]
                %2188 = vst [vmem:[%s2164 + $0xa8] sm:$0xff] %v2187
                %v2189 = vld [vmem:[%s2163 + $0x60] sm:$0xff]
                %2190 = vst [vmem:[%s2164 + $0xc0] sm:$0xff] %v2189
                %v2191 = vld [vmem:[%s2163 + $0x68] sm:$0xff]
                %2192 = vst [vmem:[%s2164 + $0xc8] sm:$0xff] %v2191
                %v2193 = vld [vmem:[%s2163 + $0x70] sm:$0xff]
                %2194 = vst [vmem:[%s2164 + $0xe0] sm:$0xff] %v2193
                %v2195 = vld [vmem:[%s2163 + $0x78] sm:$0xff]
                %2196 = vst [vmem:[%s2164 + $0xe8] sm:$0xff] %v2195
                %v2197 = vld [vmem:[%s2163 + $0x80] sm:$0xff]
                %2198 = vst [vmem:[%s2164 + $0x100] sm:$0xff] %v2197
                %v2199 = vld [vmem:[%s2163 + $0x88] sm:$0xff]
                %2200 = vst [vmem:[%s2164 + $0x108] sm:$0xff] %v2199
                %v2201 = vld [vmem:[%s2163 + $0x90] sm:$0xff]
                %2202 = vst [vmem:[%s2164 + $0x120] sm:$0xff] %v2201
                %v2203 = vld [vmem:[%s2163 + $0x98] sm:$0xff]
                %2204 = vst [vmem:[%s2164 + $0x128] sm:$0xff] %v2203
                %v2205 = vld [vmem:[%s2163 + $0xa0] sm:$0xff]
                %2206 = vst [vmem:[%s2164 + $0x140] sm:$0xff] %v2205
                %v2207 = vld [vmem:[%s2163 + $0xa8] sm:$0xff]
                %2208 = vst [vmem:[%s2164 + $0x148] sm:$0xff] %v2207
                %v2209 = vld [vmem:[%s2163 + $0xb0] sm:$0xff]
                %2210 = vst [vmem:[%s2164 + $0x160] sm:$0xff] %v2209
                %v2211 = vld [vmem:[%s2163 + $0xb8] sm:$0xff]
                %2212 = vst [vmem:[%s2164 + $0x168] sm:$0xff] %v2211
                %v2213 = vld [vmem:[%s2163 + $0xc0] sm:$0xff]
                %2214 = vst [vmem:[%s2164 + $0x180] sm:$0xff] %v2213
                %v2215 = vld [vmem:[%s2163 + $0xc8] sm:$0xff]
                %2216 = vst [vmem:[%s2164 + $0x188] sm:$0xff] %v2215
                %v2217 = vld [vmem:[%s2163 + $0xd0] sm:$0xff]
                %2218 = vst [vmem:[%s2164 + $0x1a0] sm:$0xff] %v2217
                %v2219 = vld [vmem:[%s2163 + $0xd8] sm:$0xff]
                %2220 = vst [vmem:[%s2164 + $0x1a8] sm:$0xff] %v2219
                %v2221 = vld [vmem:[%s2163 + $0xe0] sm:$0xff]
                %2222 = vst [vmem:[%s2164 + $0x1c0] sm:$0xff] %v2221
                %v2223 = vld [vmem:[%s2163 + $0xe8] sm:$0xff]
                %2224 = vst [vmem:[%s2164 + $0x1c8] sm:$0xff] %v2223
                %v2225 = vld [vmem:[%s2163 + $0xf0] sm:$0xff]
                %2226 = vst [vmem:[%s2164 + $0x1e0] sm:$0xff] %v2225
                %v2227 = vld [vmem:[%s2163 + $0xf8] sm:$0xff]
                %2228 = vst [vmem:[%s2164 + $0x1e8] sm:$0xff] %v2227
              $region202: #{self_attention_forward.1} parent=196 // loop_footer
                %s2162 = sadd.s32 1, %s2158
              $region203: #{self_attention_forward.1} parent=196 // loop_footer_branch
                %2157 = sbr.rel target = $region199
              $region204: #{self_attention_forward.1} parent=196 // loop_exit
                _
            $region197: #{self_attention_forward.1} parent=192 // pred_fallthru
              _
            // Predicated region
            $region205: #{self_attention_forward.1} parent=192 // pred_check
              _
            $region206: #{self_attention_forward.1} parent=192 // pred_check_branch
              %2230 = sbr.rel target = $region208
            $region207: #{self_attention_forward.1} parent=192 // pred_region
              _
            $region208: #{self_attention_forward.1} parent=192 // pred_fallthru
              _
          $region193: #{self_attention_forward.1} parent=188 // pred_fallthru
            _
          %2231 = vnop
        $region189: #{self_attention_forward.1} parent=160 // pred_fallthru
          _
      $region161: #{self_attention_forward.1} parent=5 // pred_fallthru
        _
      %p2232 = scmp.le.s32.totalorder 2, %s12
      // Predicated region
      $region209: #{self_attention_forward.1} parent=5 // pred_check
        %p2233 = pneg %p2232
      $region210: #{self_attention_forward.1} parent=5 // pred_check_branch
        %2235 = sbr.rel (%p2233) target = $region212
      $region211: #{self_attention_forward.1} parent=5 // pred_region
        %s2236 = ssub.s32 %s12, 2
        // Predicated region
        $region213: #{self_attention_forward.1} parent=211 // pred_check
          %p2237 = pneg %p195
        $region214: #{self_attention_forward.1} parent=211 // pred_check_branch
          %2239 = sbr.rel (%p2237) target = $region216
        $region215: #{self_attention_forward.1} parent=211 // pred_region
          %s2240 = sand.u32 %s180, 1
          %s2241 = sand.u32 %s180, 1
          %s2242 = smul.addr %s2241, 256
          %s2243 = scalar_lea.vmem [#allocation10], %s2242
        $region216: #{self_attention_forward.1} parent=211 // pred_fallthru
          _
      $region212: #{self_attention_forward.1} parent=5 // pred_fallthru
        _
    $region6: #{self_attention_forward.1} parent=1 // loop_footer
      %s16 = sadd.s32 1, %s12
    $region7: #{self_attention_forward.1} parent=1 // loop_footer_branch
      %11 = sbr.rel target = $region3
    $region8: #{self_attention_forward.1} parent=1 // loop_exit
      _

</llo_original>
